<compile_context>
chip_gen: v5e
topology: v5e:2x2
jax: 0.10.0
libtpu: 0.0.40
codegen_flags: <defaults>
</compile_context>

<pallas_src>
import math
from functools import partial

import jax
import jax.numpy as jnp
from jax.experimental import pallas as pl
from jax.experimental.pallas import tpu as pltpu


# ----------------------------------------------------------------------------
# VMEM budget (generation-aware, conservative)
# ----------------------------------------------------------------------------
_VMEM_LIMIT = None


def _vmem_limit_bytes():
    global _VMEM_LIMIT
    if _VMEM_LIMIT is None:
        try:
            cap = int(pltpu.get_tpu_info().vmem_capacity_bytes)
        except Exception:
            cap = 128 << 20
        _VMEM_LIMIT = int(min(64 << 20, (cap * 3) // 4))
    return _VMEM_LIMIT


# ----------------------------------------------------------------------------
# In-kernel helpers
# ----------------------------------------------------------------------------
def _layernorm_f32(x, g, b, eps=1e-6):
    """PyTorch-spec LayerNorm: a*(x-mean)/(std+eps)+b, std unbiased (ddof=1)."""
    mu = jnp.mean(x, axis=-1, keepdims=True)
    xc = x - mu
    var = jnp.sum(xc * xc, axis=-1, keepdims=True) / (x.shape[-1] - 1)
    inv = pl.reciprocal(jnp.sqrt(var) + eps, approx=True)   # EUP slot; VALU stays free
    return xc * inv * g + b


# ----------------------------------------------------------------------------
# Pallas kernels
# ----------------------------------------------------------------------------
def _ln_qkv_kernel(x_ref, g_ref, b_ref, w_ref, bqkv_ref, o_ref):
    """qkv = LN1(x) @ W_qkv + b_qkv   (fused pre-norm + fused QKV projection).

    The 1/sqrt(d_k) attention scale is already folded into the Q columns of W_qkv/b_qkv.
    """
    x = x_ref[...].astype(jnp.float32)                  # (TM, D)
    h = _layernorm_f32(x, g_ref[...], b_ref[...])
    y = jnp.dot(h.astype(jnp.bfloat16), w_ref[...],
                preferred_element_type=jnp.float32) + bqkv_ref[...]
    o_ref[...] = y.astype(o_ref.dtype)                  # bf16 out (halves HBM traffic)


def _attn_kernel(qkv_ref, m_ref, x_ref, wo_ref, bo_ref, o_ref, o_scr, *, n_heads):
    """One (batch, q-row-tile) step: multi-head attention + output proj + residual.

    qkv_ref : (1, S, 3D) bf16   heads packed on the lane axis; resident across q-tiles
    m_ref   : (1, 1, S)  f32    pad mask (broadcast in-kernel)
    x_ref   : (1, tq, D) f32    residual rows for this q tile
    wo_ref  : (D, D)     bf16   resident output projection
    bo_ref  : (1, D)     f32
    o_ref   : (1, tq, D) bf16   lane-dense output slab
    o_scr   : (tq, D)    bf16   VMEM scratch: per-head outputs land here (no lane concat)
    """
    d_model = x_ref.shape[-1]
    d_k = d_model // n_heads
    tq = x_ref.shape[1]
    q_start = pl.multiple_of(pl.program_id(1) * tq, tq)

    qt = qkv_ref[0, pl.ds(q_start, tq), :]              # (tq, 3D) bf16 (q rows of this tile)
    kv = qkv_ref[0]                                     # (S, 3D) bf16

    # Additive mask bias, computed once and reused by every head (hoisted out of the loop).
    neg = jnp.where(m_ref[0] > 0.0, 0.0, -1e9).astype(jnp.float32)   # (1, S)

    # Static head loop: d_k may be < 128 so per-head lane windows must be static slices.
    # Each head's intermediates are consumed by the scratch store, bounding vreg liveness.
    for h in range(n_heads):
        lo = h * d_k
        qh = qt[:, lo:lo + d_k]                                   # scale folded into W_qkv
        kh = kv[:, d_model + lo:d_model + lo + d_k]
        vh = kv[:, 2 * d_model + lo:2 * d_model + lo + d_k]
        # contract on last axes of both -> no explicit k.T / relayout
        s = jax.lax.dot_general(qh, kh, (((1,), (1,)), ((), ())),
                                preferred_element_type=jnp.float32)
        s = s + neg
        s = s - jnp.max(s, axis=-1, keepdims=True)
        p = jnp.exp(s)
        p = p * pl.reciprocal(jnp.sum(p, axis=-1, keepdims=True), approx=True)
        o_scr[:, lo:lo + d_k] = jnp.dot(
            p.astype(jnp.bfloat16), vh,
            preferred_element_type=jnp.float32).astype(o_scr.dtype)

    # Output projection reads one aligned (tq, D) slab -> single full-depth (K=D) matmul.
    proj = jnp.dot(o_scr[...], wo_ref[...],
                   preferred_element_type=jnp.float32) + bo_ref[...]
    o_ref[0] = (x_ref[0].astype(jnp.float32) + proj).astype(o_ref.dtype)   # fused residual


def _ln_ffn_kernel(x_ref, g_ref, b_ref, w1_ref, b1_ref, w2_ref, b2_ref, o_ref):
    """y = x + relu(LN2(x) @ W1 + b1) @ W2 + b2   (whole FFN sublayer fused).

    x arrives bf16 (attention output) -> no f32 HBM round-trip between sublayers.
    """
    x = x_ref[...].astype(jnp.float32)                  # (TM, D)
    h = _layernorm_f32(x, g_ref[...], b_ref[...])
    h1 = jnp.dot(h.astype(jnp.bfloat16), w1_ref[...],
                 preferred_element_type=jnp.float32) + b1_ref[...]
    h1 = jnp.maximum(h1, 0.0)
    y = jnp.dot(h1.astype(jnp.bfloat16), w2_ref[...],
                preferred_element_type=jnp.float32) + b2_ref[...]
    o_ref[...] = (x + y).astype(o_ref.dtype)            # fused residual, f32 out


# ----------------------------------------------------------------------------
# Pallas wrappers
# ----------------------------------------------------------------------------
def _row_tile(rows):
    # TODO(synk): on v6e (128 MiB VMEM) 1024-row tiles measure ~1% better; keep 512 so
    # the same tiling also fits v7x's 64 MiB VMEM at production d_model/d_ff.
    return rows if rows <= 512 else 512


def _q_tile(seq):
    if seq <= 512:
        return seq
    for t in (512, 256, 128):
        if seq % t == 0:
            return t
    return seq


def ln_qkv(x2d, g, b, w_qkv_bf16, b_qkv):
    M, D = x2d.shape
    N3 = w_qkv_bf16.shape[1]
    tm = _row_tile(M)
    return pl.pallas_call(
        _ln_qkv_kernel,
        out_shape=jax.ShapeDtypeStruct((M, N3), jnp.bfloat16),
        grid=(pl.cdiv(M, tm),),
        in_specs=[
            pl.BlockSpec((tm, D), lambda i: (i, 0)),
            pl.BlockSpec((1, D), lambda i: (0, 0)),
            pl.BlockSpec((1, D), lambda i: (0, 0)),
            pl.BlockSpec((D, N3), lambda i: (0, 0)),    # weight stays VMEM-resident
            pl.BlockSpec((1, N3), lambda i: (0, 0)),
        ],
        out_specs=pl.BlockSpec((tm, N3), lambda i: (i, 0)),
        compiler_params=pltpu.CompilerParams(
            dimension_semantics=("parallel",),
            vmem_limit_bytes=_vmem_limit_bytes()),
    )(x2d, g.reshape(1, -1), b.reshape(1, -1), w_qkv_bf16, b_qkv.reshape(1, -1))


def attention_block(qkv, mask, x, wo_bf16, bo, n_heads):
    B, S, D3 = qkv.shape
    D = x.shape[-1]
    tq = _q_tile(S)
    return pl.pallas_call(
        partial(_attn_kernel, n_heads=n_heads),
        out_shape=jax.ShapeDtypeStruct((B, S, D), jnp.bfloat16),   # bf16 residual -> FFN
        grid=(B, pl.cdiv(S, tq)),
        in_specs=[
            pl.BlockSpec((1, S, D3), lambda bi, qi: (bi, 0, 0)),   # K/V resident per batch
            pl.BlockSpec((1, 1, S), lambda bi, qi: (bi, 0, 0)),
            pl.BlockSpec((1, tq, D), lambda bi, qi: (bi, qi, 0)),  # residual q rows
            pl.BlockSpec((D, D), lambda bi, qi: (0, 0)),           # wo resident
            pl.BlockSpec((1, D), lambda bi, qi: (0, 0)),
        ],
        out_specs=pl.BlockSpec((1, tq, D), lambda bi, qi: (bi, qi, 0)),
        scratch_shapes=[pltpu.VMEM((tq, D), jnp.bfloat16)],        # lane-dense head slab
        compiler_params=pltpu.CompilerParams(
            dimension_semantics=("parallel", "parallel"),
            vmem_limit_bytes=_vmem_limit_bytes()),
    )(qkv, mask, x, wo_bf16, bo.reshape(1, -1))


def ln_ffn(x2d, g, b, w1_bf16, b1, w2_bf16, b2):
    M, D = x2d.shape
    Dff = w1_bf16.shape[1]
    tm = _row_tile(M)
    return pl.pallas_call(
        _ln_ffn_kernel,
        out_shape=jax.ShapeDtypeStruct((M, D), jnp.float32),
        grid=(pl.cdiv(M, tm),),
        in_specs=[
            pl.BlockSpec((tm, D), lambda i: (i, 0)),
            pl.BlockSpec((1, D), lambda i: (0, 0)),
            pl.BlockSpec((1, D), lambda i: (0, 0)),
            pl.BlockSpec((D, Dff), lambda i: (0, 0)),
            pl.BlockSpec((1, Dff), lambda i: (0, 0)),
            pl.BlockSpec((Dff, D), lambda i: (0, 0)),
            pl.BlockSpec((1, D), lambda i: (0, 0)),
        ],
        out_specs=pl.BlockSpec((tm, D), lambda i: (i, 0)),
        compiler_params=pltpu.CompilerParams(
            dimension_semantics=("parallel",),
            vmem_limit_bytes=_vmem_limit_bytes()),
    )(x2d, g.reshape(1, -1), b.reshape(1, -1), w1_bf16, b1.reshape(1, -1),
      w2_bf16, b2.reshape(1, -1))


# ----------------------------------------------------------------------------
# Parameter prep (fold QKV, fold attention scale, cast MXU weights to bf16)
# ----------------------------------------------------------------------------
def prepare_params(raw, n_heads):
    D = raw["wq"].shape[0]
    d_k = D // n_heads
    scale = 1.0 / math.sqrt(d_k)                         # folded into Q projection: free
    w_qkv = jnp.concatenate([raw["wq"] * scale, raw["wk"], raw["wv"]], axis=1)
    b_qkv = jnp.concatenate([raw["bq"] * scale, raw["bk"], raw["bv"]], axis=0)
    return {
        "ln1_g": raw["ln1_g"], "ln1_b": raw["ln1_b"],
        "ln2_g": raw["ln2_g"], "ln2_b": raw["ln2_b"],
        "w_qkv": w_qkv.astype(jnp.bfloat16), "b_qkv": b_qkv,
        "wo": raw["wo"].astype(jnp.bfloat16), "bo": raw["bo"],
        "w1": raw["w1"].astype(jnp.bfloat16), "b1": raw["b1"],
        "w2": raw["w2"].astype(jnp.bfloat16), "b2": raw["b2"],
    }


# ----------------------------------------------------------------------------
# EncoderLayer.forward
# ----------------------------------------------------------------------------
def encoder_layer_forward(params, x, mask, n_heads):
    """x: (B, S, D) f32, mask: (B, 1, S) f32 pad mask. Dropout = identity (eval)."""
    B, S, D = x.shape
    rows = B * S

    # Sublayer 0: x + SelfAttn(LN1(x), mask)
    qkv = ln_qkv(x.reshape(rows, D), params["ln1_g"], params["ln1_b"],
                 params["w_qkv"], params["b_qkv"]).reshape(B, S, 3 * D)
    x_attn = attention_block(qkv, mask, x, params["wo"], params["bo"], n_heads)  # bf16

    # Sublayer 1: x + FFN(LN2(x))   (reads the bf16 residual directly)
    y = ln_ffn(x_attn.reshape(rows, D), params["ln2_g"], params["ln2_b"],
               params["w1"], params["b1"], params["w2"], params["b2"])
    return y.reshape(B, S, D)


# ----------------------------------------------------------------------------
# Pure-JAX reference (f32, PyTorch semantics) for a numerical sanity check
# ----------------------------------------------------------------------------
def _reference_forward(raw, x, mask, n_heads):
    B, S, D = x.shape
    d_k = D // n_heads

    def ln(t, g, b, eps=1e-6):
        mu = t.mean(-1, keepdims=True)
        tc = t - mu
        std = jnp.sqrt((tc * tc).sum(-1, keepdims=True) / (t.shape[-1] - 1))
        return tc / (std + eps) * g + b

    h = ln(x, raw["ln1_g"], raw["ln1_b"])
    q = h @ raw["wq"] + raw["bq"]
    k = h @ raw["wk"] + raw["bk"]
    v = h @ raw["wv"] + raw["bv"]

    def heads(t):
        return t.reshape(B, S, n_heads, d_k).transpose(0, 2, 1, 3)

    q, k, v = heads(q), heads(k), heads(v)
    s = jnp.einsum("bhqd,bhkd->bhqk", q, k) / math.sqrt(d_k)
    s = jnp.where(mask[:, None, :, :] > 0.0, s, -1e9)
    p = jax.nn.softmax(s, axis=-1)
    o = jnp.einsum("bhqk,bhkd->bhqd", p, v).transpose(0, 2, 1, 3).reshape(B, S, D)
    x = x + o @ raw["wo"] + raw["bo"]

    h = ln(x, raw["ln2_g"], raw["ln2_b"])
    ff = jnp.maximum(h @ raw["w1"] + raw["b1"], 0.0)
    ff = ff @ raw["w2"] + raw["b2"]
    return x + ff


# ----------------------------------------------------------------------------
if __name__ == "__main__":
    # d_k = 128 -> full-depth MXU score matmul on v6e/v7x (fewer, wider heads).
    B, S, D_MODEL, N_HEADS, D_FF = 2, 8, 256, 2, 512

    key = jax.random.PRNGKey(0)
    ks = jax.random.split(key, 16)

    def w(k, shape):
        return jax.random.normal(k, shape, jnp.float32) * 0.02

    raw = {
        "ln1_g": jnp.ones((D_MODEL,), jnp.float32),
        "ln1_b": jnp.zeros((D_MODEL,), jnp.float32),
        "ln2_g": jnp.ones((D_MODEL,), jnp.float32),
        "ln2_b": jnp.zeros((D_MODEL,), jnp.float32),
        "wq": w(ks[0], (D_MODEL, D_MODEL)), "bq": w(ks[1], (D_MODEL,)),
        "wk": w(ks[2], (D_MODEL, D_MODEL)), "bk": w(ks[3], (D_MODEL,)),
        "wv": w(ks[4], (D_MODEL, D_MODEL)), "bv": w(ks[5], (D_MODEL,)),
        "wo": w(ks[6], (D_MODEL, D_MODEL)), "bo": w(ks[7], (D_MODEL,)),
        "w1": w(ks[8], (D_MODEL, D_FF)),    "b1": w(ks[9], (D_FF,)),
        "w2": w(ks[10], (D_FF, D_MODEL)),   "b2": w(ks[11], (D_MODEL,)),
    }
    params = prepare_params(raw, N_HEADS)

    x = jax.random.normal(ks[12], (B, S, D_MODEL), jnp.float32)
    mask = jnp.ones((B, 1, S), jnp.float32)
    mask = mask.at[1, 0, S - 2:].set(0.0)   # pad out last 2 keys of batch 1

    fwd = jax.jit(partial(encoder_layer_forward, n_heads=N_HEADS))
    out = jax.block_until_ready(fwd(params, x, mask))

    assert out.shape == (B, S, D_MODEL) and out.dtype == jnp.float32
    assert bool(jnp.all(jnp.isfinite(out)))

    ref = _reference_forward(raw, x, mask, N_HEADS)
    max_err = float(jnp.max(jnp.abs(out - ref)))
    assert max_err < 5e-2, f"max abs error vs f32 reference too large: {max_err}"

    print("KERNEL_OK")
</pallas_src>

<mosaic_0001>
module attributes {stable_mosaic.version = 11 : i64} {
  func.func @_ln_qkv_kernel(%arg0: i32, %arg1: memref<16x256xf32, #tpu.memory_space<vmem>>, %arg2: memref<1x256xf32, #tpu.memory_space<vmem>>, %arg3: memref<1x256xf32, #tpu.memory_space<vmem>>, %arg4: memref<256x768xbf16, #tpu.memory_space<vmem>>, %arg5: memref<1x768xf32, #tpu.memory_space<vmem>>, %arg6: memref<16x768xbf16, #tpu.memory_space<vmem>>) attributes {dimension_semantics = [#tpu.dimension_semantics<parallel>], iteration_bounds = array<i64: 1>, scalar_prefetch = 0 : i64, scratch_operands = 0 : i64, tpu.core_type = #tpu.core_type<tc>, window_params = [{transform_indices = @transform_0, window_bounds = array<i64: 16, 256>}, {pipeline_mode = #tpu.pipeline_mode<synchronous>, transform_indices = @transform_1, window_bounds = array<i64: 1, 256>}, {pipeline_mode = #tpu.pipeline_mode<synchronous>, transform_indices = @transform_2, window_bounds = array<i64: 1, 256>}, {pipeline_mode = #tpu.pipeline_mode<synchronous>, transform_indices = @transform_3, window_bounds = array<i64: 256, 768>}, {pipeline_mode = #tpu.pipeline_mode<synchronous>, transform_indices = @transform_4, window_bounds = array<i64: 1, 768>}, {transform_indices = @transform_5, window_bounds = array<i64: 16, 768>}]} {
    %c0 = arith.constant 0 : index
    %c0_0 = arith.constant 0 : index
    %0 = vector.load %arg1[%c0, %c0_0] : memref<16x256xf32, #tpu.memory_space<vmem>>, vector<16x256xf32>
    %c0_1 = arith.constant 0 : index
    %c0_2 = arith.constant 0 : index
    %1 = vector.load %arg2[%c0_1, %c0_2] : memref<1x256xf32, #tpu.memory_space<vmem>>, vector<1x256xf32>
    %c0_3 = arith.constant 0 : index
    %c0_4 = arith.constant 0 : index
    %2 = vector.load %arg3[%c0_3, %c0_4] : memref<1x256xf32, #tpu.memory_space<vmem>>, vector<1x256xf32>
    %cst = arith.constant dense<0.000000e+00> : vector<16xf32>
    %3 = vector.multi_reduction <add>, %0, %cst [1] : vector<16x256xf32> to vector<16xf32>
    %4 = vector.shape_cast %3 : vector<16xf32> to vector<16x1xf32>
    %cst_5 = arith.constant 2.560000e+02 : f32
    %5 = vector.broadcast %cst_5 : f32 to vector<16x1xf32>
    %6 = arith.divf %4, %5 : vector<16x1xf32>
    %7 = vector.broadcast %6 : vector<16x1xf32> to vector<16x256xf32>
    %8 = arith.subf %0, %7 : vector<16x256xf32>
    %9 = arith.mulf %8, %8 : vector<16x256xf32>
    %cst_6 = arith.constant dense<0.000000e+00> : vector<16xf32>
    %10 = vector.multi_reduction <add>, %9, %cst_6 [1] : vector<16x256xf32> to vector<16xf32>
    %11 = vector.shape_cast %10 : vector<16xf32> to vector<16x1xf32>
    %cst_7 = arith.constant 2.550000e+02 : f32
    %12 = vector.broadcast %cst_7 : f32 to vector<16x1xf32>
    %13 = arith.divf %11, %12 : vector<16x1xf32>
    %14 = math.sqrt %13 : vector<16x1xf32>
    %cst_8 = arith.constant 9.99999997E-7 : f32
    %15 = vector.broadcast %cst_8 : f32 to vector<16x1xf32>
    %16 = arith.addf %14, %15 : vector<16x1xf32>
    %17 = tpu.reciprocal %16 {approx = true} : vector<16x1xf32> -> vector<16x1xf32>
    %18 = vector.broadcast %17 : vector<16x1xf32> to vector<16x256xf32>
    %19 = arith.mulf %8, %18 : vector<16x256xf32>
    %20 = vector.broadcast %1 : vector<1x256xf32> to vector<16x256xf32>
    %21 = arith.mulf %19, %20 : vector<16x256xf32>
    %22 = vector.broadcast %2 : vector<1x256xf32> to vector<16x256xf32>
    %23 = arith.addf %21, %22 : vector<16x256xf32>
    %24 = arith.truncf %23 : vector<16x256xf32> to vector<16x256xbf16>
    %c0_9 = arith.constant 0 : index
    %c0_10 = arith.constant 0 : index
    %25 = vector.load %arg4[%c0_9, %c0_10] : memref<256x768xbf16, #tpu.memory_space<vmem>>, vector<256x768xbf16>
    %cst_11 = arith.constant dense<0.000000e+00> : vector<16x768xf32>
    %26 = tpu.matmul %24, %25, %cst_11 {dimension_numbers = #tpu.dot_dimension_numbers<[1], [0], [0], [1], [0, 0, 1, 1], [], []>} : vector<16x256xbf16>, vector<256x768xbf16>, vector<16x768xf32> -> vector<16x768xf32>
    %c0_12 = arith.constant 0 : index
    %c0_13 = arith.constant 0 : index
    %27 = vector.load %arg5[%c0_12, %c0_13] : memref<1x768xf32, #tpu.memory_space<vmem>>, vector<1x768xf32>
    %28 = vector.broadcast %27 : vector<1x768xf32> to vector<16x768xf32>
    %29 = arith.addf %26, %28 : vector<16x768xf32>
    %30 = arith.truncf %29 : vector<16x768xf32> to vector<16x768xbf16>
    %c0_14 = arith.constant 0 : index
    %c0_15 = arith.constant 0 : index
    %31 = vector.load %arg6[%c0_14, %c0_15] : memref<16x768xbf16, #tpu.memory_space<vmem>>, vector<16x768xbf16>
    tpu.vector_store %arg6[%c0_14, %c0_15], %30 {strides = array<i32>} : memref<16x768xbf16, #tpu.memory_space<vmem>>, vector<16x768xbf16>,
    return
  }
  func.func @transform_0(%arg0: i32) -> (i32, i32) {
    %c0_i32 = arith.constant 0 : i32
    %c0_i32_0 = arith.constant 0 : i32
    return %arg0, %c0_i32 : i32, i32
  }
  func.func @transform_1(%arg0: i32) -> (i32, i32) {
    %c0_i32 = arith.constant 0 : i32
    %c0_i32_0 = arith.constant 0 : i32
    %c0_i32_1 = arith.constant 0 : i32
    return %c0_i32, %c0_i32_0 : i32, i32
  }
  func.func @transform_2(%arg0: i32) -> (i32, i32) {
    %c0_i32 = arith.constant 0 : i32
    %c0_i32_0 = arith.constant 0 : i32
    %c0_i32_1 = arith.constant 0 : i32
    return %c0_i32, %c0_i32_0 : i32, i32
  }
  func.func @transform_3(%arg0: i32) -> (i32, i32) {
    %c0_i32 = arith.constant 0 : i32
    %c0_i32_0 = arith.constant 0 : i32
    %c0_i32_1 = arith.constant 0 : i32
    return %c0_i32, %c0_i32_0 : i32, i32
  }
  func.func @transform_4(%arg0: i32) -> (i32, i32) {
    %c0_i32 = arith.constant 0 : i32
    %c0_i32_0 = arith.constant 0 : i32
    %c0_i32_1 = arith.constant 0 : i32
    return %c0_i32, %c0_i32_0 : i32, i32
  }
  func.func @transform_5(%arg0: i32) -> (i32, i32) {
    %c0_i32 = arith.constant 0 : i32
    %c0_i32_0 = arith.constant 0 : i32
    return %arg0, %c0_i32 : i32, i32
  }
}

module attributes {stable_mosaic.version = 11 : i64} {
  func.func @_attn_kernel(%arg0: i32, %arg1: i32, %arg2: memref<1x8x768xbf16, #tpu.memory_space<vmem>>, %arg3: memref<1x1x8xf32, #tpu.memory_space<vmem>>, %arg4: memref<1x8x256xf32, #tpu.memory_space<vmem>>, %arg5: memref<256x256xbf16, #tpu.memory_space<vmem>>, %arg6: memref<1x256xf32, #tpu.memory_space<vmem>>, %arg7: memref<1x8x256xbf16, #tpu.memory_space<vmem>>, %arg8: memref<8x256xbf16, #tpu.memory_space<vmem>>) attributes {dimension_semantics = [#tpu.dimension_semantics<parallel>, #tpu.dimension_semantics<parallel>], iteration_bounds = array<i64: 2, 1>, scalar_prefetch = 0 : i64, scratch_operands = 1 : i64, tpu.core_type = #tpu.core_type<tc>, window_params = [{transform_indices = @transform_0, window_bounds = array<i64: 1, 8, 768>}, {transform_indices = @transform_1, window_bounds = array<i64: 1, 1, 8>}, {transform_indices = @transform_2, window_bounds = array<i64: 1, 8, 256>}, {pipeline_mode = #tpu.pipeline_mode<synchronous>, transform_indices = @transform_3, window_bounds = array<i64: 256, 256>}, {pipeline_mode = #tpu.pipeline_mode<synchronous>, transform_indices = @transform_4, window_bounds = array<i64: 1, 256>}, {transform_indices = @transform_5, window_bounds = array<i64: 1, 8, 256>}]} {
    %c8_i32 = arith.constant 8 : i32
    %0 = arith.muli %arg1, %c8_i32 : i32
    %1 = tpu.assume_multiple %0, 8 : i32
    %c0 = arith.constant 0 : index
    %2 = arith.index_cast %1 : i32 to index
    %c0_0 = arith.constant 0 : index
    %3 = vector.load %arg2[%c0, %2, %c0_0] : memref<1x8x768xbf16, #tpu.memory_space<vmem>>, vector<1x8x768xbf16>
    %4 = vector.shape_cast %3 : vector<1x8x768xbf16> to vector<8x768xbf16>
    %c0_1 = arith.constant 0 : index
    %c0_2 = arith.constant 0 : index
    %c0_3 = arith.constant 0 : index
    %5 = vector.load %arg2[%c0_1, %c0_2, %c0_3] : memref<1x8x768xbf16, #tpu.memory_space<vmem>>, vector<1x8x768xbf16>
    %6 = vector.shape_cast %5 : vector<1x8x768xbf16> to vector<8x768xbf16>
    %c0_4 = arith.constant 0 : index
    %c0_5 = arith.constant 0 : index
    %c0_6 = arith.constant 0 : index
    %7 = vector.load %arg3[%c0_4, %c0_5, %c0_6] : memref<1x1x8xf32, #tpu.memory_space<vmem>>, vector<1x1x8xf32>
    %8 = vector.shape_cast %7 : vector<1x1x8xf32> to vector<1x8xf32>
    %cst = arith.constant 0.000000e+00 : f32
    %9 = vector.broadcast %cst : f32 to vector<1x8xf32>
    %10 = arith.cmpf ogt, %8, %9 : vector<1x8xf32>
    %cst_7 = arith.constant 0.000000e+00 : f32
    %cst_8 = arith.constant -1.000000e+09 : f32
    %11 = vector.broadcast %cst_7 : f32 to vector<1x8xf32>
    %12 = vector.broadcast %cst_8 : f32 to vector<1x8xf32>
    %13 = arith.select %10, %11, %12 : vector<1x8xi1>, vector<1x8xf32>
    %14 = vector.extract_strided_slice %4 {offsets = [0, 0], sizes = [8, 128], strides = [1, 1]} : vector<8x768xbf16> to vector<8x128xbf16>
    %15 = vector.extract_strided_slice %6 {offsets = [0, 256], sizes = [8, 128], strides = [1, 1]} : vector<8x768xbf16> to vector<8x128xbf16>
    %16 = vector.extract_strided_slice %6 {offsets = [0, 512], sizes = [8, 128], strides = [1, 1]} : vector<8x768xbf16> to vector<8x128xbf16>
    %cst_9 = arith.constant dense<0.000000e+00> : vector<8x8xf32>
    %17 = tpu.matmul %14, %15, %cst_9 {dimension_numbers = #tpu.dot_dimension_numbers<[1], [1], [0], [0], [0, 0, 1, 0], [], []>} : vector<8x128xbf16>, vector<8x128xbf16>, vector<8x8xf32> -> vector<8x8xf32>
    %18 = vector.broadcast %13 : vector<1x8xf32> to vector<8x8xf32>
    %19 = arith.addf %17, %18 : vector<8x8xf32>
    %cst_10 = arith.constant dense<0xFF800000> : vector<8xf32>
    %20 = vector.multi_reduction <maximumf>, %19, %cst_10 [1] : vector<8x8xf32> to vector<8xf32>
    %21 = vector.shape_cast %20 : vector<8xf32> to vector<8x1xf32>
    %22 = vector.broadcast %21 : vector<8x1xf32> to vector<8x8xf32>
    %23 = arith.subf %19, %22 : vector<8x8xf32>
    %24 = math.exp %23 : vector<8x8xf32>
    %cst_11 = arith.constant dense<0.000000e+00> : vector<8xf32>
    %25 = vector.multi_reduction <add>, %24, %cst_11 [1] : vector<8x8xf32> to vector<8xf32>
    %26 = vector.shape_cast %25 : vector<8xf32> to vector<8x1xf32>
    %27 = tpu.reciprocal %26 {approx = true} : vector<8x1xf32> -> vector<8x1xf32>
    %28 = vector.broadcast %27 : vector<8x1xf32> to vector<8x8xf32>
    %29 = arith.mulf %24, %28 : vector<8x8xf32>
    %30 = arith.truncf %29 : vector<8x8xf32> to vector<8x8xbf16>
    %cst_12 = arith.constant dense<0.000000e+00> : vector<8x128xf32>
    %31 = tpu.matmul %30, %16, %cst_12 {dimension_numbers = #tpu.dot_dimension_numbers<[1], [0], [0], [1], [0, 0, 1, 1], [], []>} : vector<8x8xbf16>, vector<8x128xbf16>, vector<8x128xf32> -> vector<8x128xf32>
    %32 = arith.truncf %31 : vector<8x128xf32> to vector<8x128xbf16>
    %c0_13 = arith.constant 0 : index
    %c0_14 = arith.constant 0 : index
    %33 = vector.load %arg8[%c0_13, %c0_14] : memref<8x256xbf16, #tpu.memory_space<vmem>>, vector<8x128xbf16>
    tpu.vector_store %arg8[%c0_13, %c0_14], %32 {strides = array<i32>} : memref<8x256xbf16, #tpu.memory_space<vmem>>, vector<8x128xbf16>,
    %34 = vector.extract_strided_slice %4 {offsets = [0, 128], sizes = [8, 128], strides = [1, 1]} : vector<8x768xbf16> to vector<8x128xbf16>
    %35 = vector.extract_strided_slice %6 {offsets = [0, 384], sizes = [8, 128], strides = [1, 1]} : vector<8x768xbf16> to vector<8x128xbf16>
    %36 = vector.extract_strided_slice %6 {offsets = [0, 640], sizes = [8, 128], strides = [1, 1]} : vector<8x768xbf16> to vector<8x128xbf16>
    %cst_15 = arith.constant dense<0.000000e+00> : vector<8x8xf32>
    %37 = tpu.matmul %34, %35, %cst_15 {dimension_numbers = #tpu.dot_dimension_numbers<[1], [1], [0], [0], [0, 0, 1, 0], [], []>} : vector<8x128xbf16>, vector<8x128xbf16>, vector<8x8xf32> -> vector<8x8xf32>
    %38 = vector.broadcast %13 : vector<1x8xf32> to vector<8x8xf32>
    %39 = arith.addf %37, %38 : vector<8x8xf32>
    %cst_16 = arith.constant dense<0xFF800000> : vector<8xf32>
    %40 = vector.multi_reduction <maximumf>, %39, %cst_16 [1] : vector<8x8xf32> to vector<8xf32>
    %41 = vector.shape_cast %40 : vector<8xf32> to vector<8x1xf32>
    %42 = vector.broadcast %41 : vector<8x1xf32> to vector<8x8xf32>
    %43 = arith.subf %39, %42 : vector<8x8xf32>
    %44 = math.exp %43 : vector<8x8xf32>
    %cst_17 = arith.constant dense<0.000000e+00> : vector<8xf32>
    %45 = vector.multi_reduction <add>, %44, %cst_17 [1] : vector<8x8xf32> to vector<8xf32>
    %46 = vector.shape_cast %45 : vector<8xf32> to vector<8x1xf32>
    %47 = tpu.reciprocal %46 {approx = true} : vector<8x1xf32> -> vector<8x1xf32>
    %48 = vector.broadcast %47 : vector<8x1xf32> to vector<8x8xf32>
    %49 = arith.mulf %44, %48 : vector<8x8xf32>
    %50 = arith.truncf %49 : vector<8x8xf32> to vector<8x8xbf16>
    %cst_18 = arith.constant dense<0.000000e+00> : vector<8x128xf32>
    %51 = tpu.matmul %50, %36, %cst_18 {dimension_numbers = #tpu.dot_dimension_numbers<[1], [0], [0], [1], [0, 0, 1, 1], [], []>} : vector<8x8xbf16>, vector<8x128xbf16>, vector<8x128xf32> -> vector<8x128xf32>
    %52 = arith.truncf %51 : vector<8x128xf32> to vector<8x128xbf16>
    %c0_19 = arith.constant 0 : index
    %c128 = arith.constant 128 : index
    %53 = vector.load %arg8[%c0_19, %c128] : memref<8x256xbf16, #tpu.memory_space<vmem>>, vector<8x128xbf16>
    tpu.vector_store %arg8[%c0_19, %c128], %52 {strides = array<i32>} : memref<8x256xbf16, #tpu.memory_space<vmem>>, vector<8x128xbf16>,
    %c0_20 = arith.constant 0 : index
    %c0_21 = arith.constant 0 : index
    %54 = vector.load %arg8[%c0_20, %c0_21] : memref<8x256xbf16, #tpu.memory_space<vmem>>, vector<8x256xbf16>
    %c0_22 = arith.constant 0 : index
    %c0_23 = arith.constant 0 : index
    %55 = vector.load %arg5[%c0_22, %c0_23] : memref<256x256xbf16, #tpu.memory_space<vmem>>, vector<256x256xbf16>
    %cst_24 = arith.constant dense<0.000000e+00> : vector<8x256xf32>
    %56 = tpu.matmul %54, %55, %cst_24 {dimension_numbers = #tpu.dot_dimension_numbers<[1], [0], [0], [1], [0, 0, 1, 1], [], []>} : vector<8x256xbf16>, vector<256x256xbf16>, vector<8x256xf32> -> vector<8x256xf32>
    %c0_25 = arith.constant 0 : index
    %c0_26 = arith.constant 0 : index
    %57 = vector.load %arg6[%c0_25, %c0_26] : memref<1x256xf32, #tpu.memory_space<vmem>>, vector<1x256xf32>
    %58 = vector.broadcast %57 : vector<1x256xf32> to vector<8x256xf32>
    %59 = arith.addf %56, %58 : vector<8x256xf32>
    %c0_27 = arith.constant 0 : index
    %c0_28 = arith.constant 0 : index
    %c0_29 = arith.constant 0 : index
    %60 = vector.load %arg4[%c0_27, %c0_28, %c0_29] : memref<1x8x256xf32, #tpu.memory_space<vmem>>, vector<1x8x256xf32>
    %61 = vector.shape_cast %60 : vector<1x8x256xf32> to vector<8x256xf32>
    %62 = arith.addf %61, %59 : vector<8x256xf32>
    %63 = arith.truncf %62 : vector<8x256xf32> to vector<8x256xbf16>
    %c0_30 = arith.constant 0 : index
    %c0_31 = arith.constant 0 : index
    %c0_32 = arith.constant 0 : index
    %64 = vector.load %arg7[%c0_30, %c0_31, %c0_32] : memref<1x8x256xbf16, #tpu.memory_space<vmem>>, vector<1x8x256xbf16>
    %65 = vector.shape_cast %64 : vector<1x8x256xbf16> to vector<8x256xbf16>
    %66 = vector.shape_cast %63 : vector<8x256xbf16> to vector<1x8x256xbf16>
    tpu.vector_store %arg7[%c0_30, %c0_31, %c0_32], %66 {strides = array<i32>} : memref<1x8x256xbf16, #tpu.memory_space<vmem>>, vector<1x8x256xbf16>,
    return
  }
  func.func @transform_0(%arg0: i32, %arg1: i32) -> (i32, i32, i32) {
    %c0_i32 = arith.constant 0 : i32
    %c0_i32_0 = arith.constant 0 : i32
    %c0_i32_1 = arith.constant 0 : i32
    return %arg0, %c0_i32, %c0_i32_0 : i32, i32, i32
  }
  func.func @transform_1(%arg0: i32, %arg1: i32) -> (i32, i32, i32) {
    %c0_i32 = arith.constant 0 : i32
    %c0_i32_0 = arith.constant 0 : i32
    %c0_i32_1 = arith.constant 0 : i32
    return %arg0, %c0_i32, %c0_i32_0 : i32, i32, i32
  }
  func.func @transform_2(%arg0: i32, %arg1: i32) -> (i32, i32, i32) {
    %c0_i32 = arith.constant 0 : i32
    %c0_i32_0 = arith.constant 0 : i32
    return %arg0, %arg1, %c0_i32 : i32, i32, i32
  }
  func.func @transform_3(%arg0: i32, %arg1: i32) -> (i32, i32) {
    %c0_i32 = arith.constant 0 : i32
    %c0_i32_0 = arith.constant 0 : i32
    %c0_i32_1 = arith.constant 0 : i32
    return %c0_i32, %c0_i32_0 : i32, i32
  }
  func.func @transform_4(%arg0: i32, %arg1: i32) -> (i32, i32) {
    %c0_i32 = arith.constant 0 : i32
    %c0_i32_0 = arith.constant 0 : i32
    %c0_i32_1 = arith.constant 0 : i32
    return %c0_i32, %c0_i32_0 : i32, i32
  }
  func.func @transform_5(%arg0: i32, %arg1: i32) -> (i32, i32, i32) {
    %c0_i32 = arith.constant 0 : i32
    %c0_i32_0 = arith.constant 0 : i32
    return %arg0, %arg1, %c0_i32 : i32, i32, i32
  }
}

module attributes {stable_mosaic.version = 11 : i64} {
  func.func @_ln_ffn_kernel(%arg0: i32, %arg1: memref<16x256xbf16, #tpu.memory_space<vmem>>, %arg2: memref<1x256xf32, #tpu.memory_space<vmem>>, %arg3: memref<1x256xf32, #tpu.memory_space<vmem>>, %arg4: memref<256x512xbf16, #tpu.memory_space<vmem>>, %arg5: memref<1x512xf32, #tpu.memory_space<vmem>>, %arg6: memref<512x256xbf16, #tpu.memory_space<vmem>>, %arg7: memref<1x256xf32, #tpu.memory_space<vmem>>, %arg8: memref<16x256xf32, #tpu.memory_space<vmem>>) attributes {dimension_semantics = [#tpu.dimension_semantics<parallel>], iteration_bounds = array<i64: 1>, scalar_prefetch = 0 : i64, scratch_operands = 0 : i64, tpu.core_type = #tpu.core_type<tc>, window_params = [{transform_indices = @transform_0, window_bounds = array<i64: 16, 256>}, {pipeline_mode = #tpu.pipeline_mode<synchronous>, transform_indices = @transform_1, window_bounds = array<i64: 1, 256>}, {pipeline_mode = #tpu.pipeline_mode<synchronous>, transform_indices = @transform_2, window_bounds = array<i64: 1, 256>}, {pipeline_mode = #tpu.pipeline_mode<synchronous>, transform_indices = @transform_3, window_bounds = array<i64: 256, 512>}, {pipeline_mode = #tpu.pipeline_mode<synchronous>, transform_indices = @transform_4, window_bounds = array<i64: 1, 512>}, {pipeline_mode = #tpu.pipeline_mode<synchronous>, transform_indices = @transform_5, window_bounds = array<i64: 512, 256>}, {pipeline_mode = #tpu.pipeline_mode<synchronous>, transform_indices = @transform_6, window_bounds = array<i64: 1, 256>}, {transform_indices = @transform_7, window_bounds = array<i64: 16, 256>}]} {
    %c0 = arith.constant 0 : index
    %c0_0 = arith.constant 0 : index
    %0 = vector.load %arg1[%c0, %c0_0] : memref<16x256xbf16, #tpu.memory_space<vmem>>, vector<16x256xbf16>
    %1 = arith.extf %0 : vector<16x256xbf16> to vector<16x256xf32>
    %c0_1 = arith.constant 0 : index
    %c0_2 = arith.constant 0 : index
    %2 = vector.load %arg2[%c0_1, %c0_2] : memref<1x256xf32, #tpu.memory_space<vmem>>, vector<1x256xf32>
    %c0_3 = arith.constant 0 : index
    %c0_4 = arith.constant 0 : index
    %3 = vector.load %arg3[%c0_3, %c0_4] : memref<1x256xf32, #tpu.memory_space<vmem>>, vector<1x256xf32>
    %cst = arith.constant dense<0.000000e+00> : vector<16xf32>
    %4 = vector.multi_reduction <add>, %1, %cst [1] : vector<16x256xf32> to vector<16xf32>
    %5 = vector.shape_cast %4 : vector<16xf32> to vector<16x1xf32>
    %cst_5 = arith.constant 2.560000e+02 : f32
    %6 = vector.broadcast %cst_5 : f32 to vector<16x1xf32>
    %7 = arith.divf %5, %6 : vector<16x1xf32>
    %8 = vector.broadcast %7 : vector<16x1xf32> to vector<16x256xf32>
    %9 = arith.subf %1, %8 : vector<16x256xf32>
    %10 = arith.mulf %9, %9 : vector<16x256xf32>
    %cst_6 = arith.constant dense<0.000000e+00> : vector<16xf32>
    %11 = vector.multi_reduction <add>, %10, %cst_6 [1] : vector<16x256xf32> to vector<16xf32>
    %12 = vector.shape_cast %11 : vector<16xf32> to vector<16x1xf32>
    %cst_7 = arith.constant 2.550000e+02 : f32
    %13 = vector.broadcast %cst_7 : f32 to vector<16x1xf32>
    %14 = arith.divf %12, %13 : vector<16x1xf32>
    %15 = math.sqrt %14 : vector<16x1xf32>
    %cst_8 = arith.constant 9.99999997E-7 : f32
    %16 = vector.broadcast %cst_8 : f32 to vector<16x1xf32>
    %17 = arith.addf %15, %16 : vector<16x1xf32>
    %18 = tpu.reciprocal %17 {approx = true} : vector<16x1xf32> -> vector<16x1xf32>
    %19 = vector.broadcast %18 : vector<16x1xf32> to vector<16x256xf32>
    %20 = arith.mulf %9, %19 : vector<16x256xf32>
    %21 = vector.broadcast %2 : vector<1x256xf32> to vector<16x256xf32>
    %22 = arith.mulf %20, %21 : vector<16x256xf32>
    %23 = vector.broadcast %3 : vector<1x256xf32> to vector<16x256xf32>
    %24 = arith.addf %22, %23 : vector<16x256xf32>
    %25 = arith.truncf %24 : vector<16x256xf32> to vector<16x256xbf16>
    %c0_9 = arith.constant 0 : index
    %c0_10 = arith.constant 0 : index
    %26 = vector.load %arg4[%c0_9, %c0_10] : memref<256x512xbf16, #tpu.memory_space<vmem>>, vector<256x512xbf16>
    %cst_11 = arith.constant dense<0.000000e+00> : vector<16x512xf32>
    %27 = tpu.matmul %25, %26, %cst_11 {dimension_numbers = #tpu.dot_dimension_numbers<[1], [0], [0], [1], [0, 0, 1, 1], [], []>} : vector<16x256xbf16>, vector<256x512xbf16>, vector<16x512xf32> -> vector<16x512xf32>
    %c0_12 = arith.constant 0 : index
    %c0_13 = arith.constant 0 : index
    %28 = vector.load %arg5[%c0_12, %c0_13] : memref<1x512xf32, #tpu.memory_space<vmem>>, vector<1x512xf32>
    %29 = vector.broadcast %28 : vector<1x512xf32> to vector<16x512xf32>
    %30 = arith.addf %27, %29 : vector<16x512xf32>
    %cst_14 = arith.constant 0.000000e+00 : f32
    %31 = vector.broadcast %cst_14 : f32 to vector<16x512xf32>
    %32 = arith.maximumf %30, %31 : vector<16x512xf32>
    %33 = arith.truncf %32 : vector<16x512xf32> to vector<16x512xbf16>
    %c0_15 = arith.constant 0 : index
    %c0_16 = arith.constant 0 : index
    %34 = vector.load %arg6[%c0_15, %c0_16] : memref<512x256xbf16, #tpu.memory_space<vmem>>, vector<512x256xbf16>
    %cst_17 = arith.constant dense<0.000000e+00> : vector<16x256xf32>
    %35 = tpu.matmul %33, %34, %cst_17 {dimension_numbers = #tpu.dot_dimension_numbers<[1], [0], [0], [1], [0, 0, 1, 1], [], []>} : vector<16x512xbf16>, vector<512x256xbf16>, vector<16x256xf32> -> vector<16x256xf32>
    %c0_18 = arith.constant 0 : index
    %c0_19 = arith.constant 0 : index
    %36 = vector.load %arg7[%c0_18, %c0_19] : memref<1x256xf32, #tpu.memory_space<vmem>>, vector<1x256xf32>
    %37 = vector.broadcast %36 : vector<1x256xf32> to vector<16x256xf32>
    %38 = arith.addf %35, %37 : vector<16x256xf32>
    %39 = arith.addf %1, %38 : vector<16x256xf32>
    %c0_20 = arith.constant 0 : index
    %c0_21 = arith.constant 0 : index
    %40 = vector.load %arg8[%c0_20, %c0_21] : memref<16x256xf32, #tpu.memory_space<vmem>>, vector<16x256xf32>
    tpu.vector_store %arg8[%c0_20, %c0_21], %39 {strides = array<i32>} : memref<16x256xf32, #tpu.memory_space<vmem>>, vector<16x256xf32>,
    return
  }
  func.func @transform_0(%arg0: i32) -> (i32, i32) {
    %c0_i32 = arith.constant 0 : i32
    %c0_i32_0 = arith.constant 0 : i32
    return %arg0, %c0_i32 : i32, i32
  }
  func.func @transform_1(%arg0: i32) -> (i32, i32) {
    %c0_i32 = arith.constant 0 : i32
    %c0_i32_0 = arith.constant 0 : i32
    %c0_i32_1 = arith.constant 0 : i32
    return %c0_i32, %c0_i32_0 : i32, i32
  }
  func.func @transform_2(%arg0: i32) -> (i32, i32) {
    %c0_i32 = arith.constant 0 : i32
    %c0_i32_0 = arith.constant 0 : i32
    %c0_i32_1 = arith.constant 0 : i32
    return %c0_i32, %c0_i32_0 : i32, i32
  }
  func.func @transform_3(%arg0: i32) -> (i32, i32) {
    %c0_i32 = arith.constant 0 : i32
    %c0_i32_0 = arith.constant 0 : i32
    %c0_i32_1 = arith.constant 0 : i32
    return %c0_i32, %c0_i32_0 : i32, i32
  }
  func.func @transform_4(%arg0: i32) -> (i32, i32) {
    %c0_i32 = arith.constant 0 : i32
    %c0_i32_0 = arith.constant 0 : i32
    %c0_i32_1 = arith.constant 0 : i32
    return %c0_i32, %c0_i32_0 : i32, i32
  }
  func.func @transform_5(%arg0: i32) -> (i32, i32) {
    %c0_i32 = arith.constant 0 : i32
    %c0_i32_0 = arith.constant 0 : i32
    %c0_i32_1 = arith.constant 0 : i32
    return %c0_i32, %c0_i32_0 : i32, i32
  }
  func.func @transform_6(%arg0: i32) -> (i32, i32) {
    %c0_i32 = arith.constant 0 : i32
    %c0_i32_0 = arith.constant 0 : i32
    %c0_i32_1 = arith.constant 0 : i32
    return %c0_i32, %c0_i32_0 : i32, i32
  }
  func.func @transform_7(%arg0: i32) -> (i32, i32) {
    %c0_i32 = arith.constant 0 : i32
    %c0_i32_0 = arith.constant 0 : i32
    return %arg0, %c0_i32 : i32, i32
  }
}

</mosaic_0001>

<llo_original>
// kernel: encoder_layer_forward.4
$region0: #{encoder_layer_forward.4}
  #allocation0 [shape = 'u32[]', space=smem, size = 0x4, offset = 0x4, fixed_abs, tag = 'smem constant byte address 0x4 - core index']
  #allocation1 [shape = 'u32[72,128]{1,0:T(1,128)}', space=vmem, size = 0x9000, scoped, tag = 'internal scratch']
  #allocation2 [shape = 'bf16[8,256]{1,0:T(8,128)(2,1)}', space=vmem, size = 0x1000, scoped, tag = 'scratch operand']
  %s0 = inlined_call_operand.vmem [shape: bf16[2,8,768], index: 0, kind: input, shape index: {}]
  %s1 = inlined_call_operand.vmem [shape: f32[2,1,8], index: 1, kind: input, shape index: {}]
  %s2 = inlined_call_operand.hbm [shape: f32[2,8,256], index: 2, kind: input, shape index: {}]
  %s3 = inlined_call_operand.hbm [shape: bf16[256,256], index: 3, kind: input, shape index: {}]
  %s4 = inlined_call_operand.vmem [shape: f32[1,256], index: 4, kind: input, shape index: {}]
  %s5 = inlined_call_operand.vmem [shape: bf16[2,8,256], index: 5, kind: output, shape index: {}]
  %s6 = sld [smem:[#allocation0]]
  $region61: #{encoder_layer_forward.4} parent=0
    _
  %s8 = ssub.s32 1, %s6
  %s9 = scalar_select 0, %s8, %s6
  $region1: #{encoder_layer_forward.4} parent=0
    #allocation3 [shape = 'u8[16384]{0}', space=vmem, size = 0x4000, scoped, tag = 'input window, operand 2']
    #allocation4 [shape = 's32[2]{0}', space=sflag, size = 0x8, scoped, tag = 'scoped memory for encoder_layer_forward.4']
    #allocation5 [shape = 'u8[131072]{0}', space=vmem, size = 0x20000, scoped, tag = 'input window, operand 3, single buffered']
    #allocation6 [shape = 's32[1]{0}', space=sflag, size = 0x4, scoped, tag = 'scoped memory for encoder_layer_forward.4']
    %10 = vsyncpa [#allocation4], 0
    %s11 = scalar_lea.sflag [#allocation4], 1
    %12 = vsyncpa %s11, 0
    %13 = vsyncpa [#allocation6], 0
    loop: start=0, step=1, limit=4
    $region2: #{encoder_layer_forward.4} parent=1 // loop_pre_header
      _
    $region3: #{encoder_layer_forward.4} parent=1 // loop_header
      %s15 = sphi 0, %s19
      %p16 = scmp.ge.s32.totalorder %s15, 4
      %s22 = sphi 0, %s34
      %s23 = sphi 0, %s30
      %s24 = sphi 0, %s22
      %s25 = sphi 0, %s23
      %s26 = sphi 0, %s24
      %s27 = sphi 0, %s25
      %s37 = sphi 0, %s39
      %s40 = sphi 0, %s37
      %s41 = sphi 0, %s40
      %s57 = sphi 0, %s41
      %s63 = sphi 0, %s65
      %s66 = sphi 0, %s63
      %s67 = sphi 0, %s66
      %s83 = sphi 0, %s67
      %s91 = sphi 0, %s93
      %s94 = sphi 0, %s91
      %s95 = sphi 0, %s94
      %s111 = sphi 0, %s95
      %s115 = sphi 0, %s115
      %s117 = sphi 0, %s115
      %s118 = sphi 0, %s117
      %s132 = sphi 0, %s118
      %s136 = sphi 0, %s136
      %s138 = sphi 0, %s136
      %s139 = sphi 0, %s138
      %s153 = sphi 0, %s139
      %s161 = sphi 0, %s163
      %s164 = sphi 0, %s161
      %s165 = sphi 0, %s164
      %s181 = sphi 0, %s165
    $region4: #{encoder_layer_forward.4} parent=1 // loop_header_branch
      %18 = sbr.rel (%p16) target = $region8
    $region5: #{encoder_layer_forward.4} parent=1 // loop_body
      %s20 = ssub.s32 %s15, 1
      %s21 = ssub.s32 %s15, 2
      %s28 = sadd.s32 1, %s23
      %p29 = scmp.ge.s32.totalorder %s28, 1
      %s30 = scalar_select %p29, 0, %s28
      %s31 = sadd.s32 1, %s22
      %s32 = scalar_select %p29, %s31, %s22
      %p33 = scmp.ge.s32.totalorder %s32, 2
      %s34 = scalar_select %p33, 0, %s32
      %s35 = ssub.s32 %s22, %s34
      %p36 = scmp.eq.s32.totalorder %s35, 0
      %s38 = sadd.s32 %s37, 1
      %s39 = scalar_select %p36, %s37, %s38
      %p42 = pneg %p36
      %p43 = scmp.eq.s32.totalorder %s15, 1
      %p44 = por %p42, %p43
      %p45 = scmp.ne.s32.totalorder %s37, %s40
      %p46 = scmp.eq.s32.totalorder %s15, 0
      %p47 = por %p45, %p46
      %p48 = scmp.ne.s32.totalorder %s37, %s40
      %p49 = scmp.eq.s32.totalorder %s20, 1
      %p50 = por %p48, %p49
      %p51 = scmp.ne.s32.totalorder %s40, %s41
      %p52 = scmp.eq.s32.totalorder %s20, 0
      %p53 = por %p51, %p52
      %p54 = scmp.ne.s32.totalorder %s40, %s41
      %p55 = scmp.eq.s32.totalorder %s21, 1
      %p56 = por %p54, %p55
      %p58 = scmp.ne.s32.totalorder %s41, %s57
      %p59 = scmp.eq.s32.totalorder %s21, 0
      %p60 = por %p58, %p59
      %s61 = ssub.s32 %s22, %s34
      %p62 = scmp.eq.s32.totalorder %s61, 0
      %s64 = sadd.s32 %s63, 1
      %s65 = scalar_select %p62, %s63, %s64
      %p68 = pneg %p62
      %p69 = scmp.eq.s32.totalorder %s15, 1
      %p70 = por %p68, %p69
      %p71 = scmp.ne.s32.totalorder %s63, %s66
      %p72 = scmp.eq.s32.totalorder %s15, 0
      %p73 = por %p71, %p72
      %p74 = scmp.ne.s32.totalorder %s63, %s66
      %p75 = scmp.eq.s32.totalorder %s20, 1
      %p76 = por %p74, %p75
      %p77 = scmp.ne.s32.totalorder %s66, %s67
      %p78 = scmp.eq.s32.totalorder %s20, 0
      %p79 = por %p77, %p78
      %p80 = scmp.ne.s32.totalorder %s66, %s67
      %p81 = scmp.eq.s32.totalorder %s21, 1
      %p82 = por %p80, %p81
      %p84 = scmp.ne.s32.totalorder %s67, %s83
      %p85 = scmp.eq.s32.totalorder %s21, 0
      %p86 = por %p84, %p85
      %s87 = ssub.s32 %s22, %s34
      %s88 = ssub.s32 %s23, %s30
      %s89 = sor.u32 %s87, %s88
      %p90 = scmp.eq.s32.totalorder %s89, 0
      %s92 = sadd.s32 %s91, 1
      %s93 = scalar_select %p90, %s91, %s92
      %p96 = pneg %p90
      %p97 = scmp.eq.s32.totalorder %s15, 1
      %p98 = por %p96, %p97
      %p99 = scmp.ne.s32.totalorder %s91, %s94
      %p100 = scmp.eq.s32.totalorder %s15, 0
      %p101 = por %p99, %p100
      %p102 = scmp.ne.s32.totalorder %s91, %s94
      %p103 = scmp.eq.s32.totalorder %s20, 1
      %p104 = por %p102, %p103
      %p105 = scmp.ne.s32.totalorder %s94, %s95
      %p106 = scmp.eq.s32.totalorder %s20, 0
      %p107 = por %p105, %p106
      %p108 = scmp.ne.s32.totalorder %s94, %s95
      %p109 = scmp.eq.s32.totalorder %s21, 1
      %p110 = por %p108, %p109
      %p112 = scmp.ne.s32.totalorder %s95, %s111
      %p113 = scmp.eq.s32.totalorder %s21, 0
      %p114 = por %p112, %p113
      %s116 = sadd.s32 %s115, 1
      %p119 = scmp.eq.s32.totalorder %s15, 1
      %p120 = scmp.ne.s32.totalorder %s115, %s117
      %p121 = scmp.eq.s32.totalorder %s15, 0
      %p122 = por %p120, %p121
      %p123 = scmp.ne.s32.totalorder %s115, %s117
      %p124 = scmp.eq.s32.totalorder %s20, 1
      %p125 = por %p123, %p124
      %p126 = scmp.ne.s32.totalorder %s117, %s118
      %p127 = scmp.eq.s32.totalorder %s20, 0
      %p128 = por %p126, %p127
      %p129 = scmp.ne.s32.totalorder %s117, %s118
      %p130 = scmp.eq.s32.totalorder %s21, 1
      %p131 = por %p129, %p130
      %p133 = scmp.ne.s32.totalorder %s118, %s132
      %p134 = scmp.eq.s32.totalorder %s21, 0
      %p135 = por %p133, %p134
      %s137 = sadd.s32 %s136, 1
      %p140 = scmp.eq.s32.totalorder %s15, 1
      %p141 = scmp.ne.s32.totalorder %s136, %s138
      %p142 = scmp.eq.s32.totalorder %s15, 0
      %p143 = por %p141, %p142
      %p144 = scmp.ne.s32.totalorder %s136, %s138
      %p145 = scmp.eq.s32.totalorder %s20, 1
      %p146 = por %p144, %p145
      %p147 = scmp.ne.s32.totalorder %s138, %s139
      %p148 = scmp.eq.s32.totalorder %s20, 0
      %p149 = por %p147, %p148
      %p150 = scmp.ne.s32.totalorder %s138, %s139
      %p151 = scmp.eq.s32.totalorder %s21, 1
      %p152 = por %p150, %p151
      %p154 = scmp.ne.s32.totalorder %s139, %s153
      %p155 = scmp.eq.s32.totalorder %s21, 0
      %p156 = por %p154, %p155
      %s157 = ssub.s32 %s22, %s34
      %s158 = ssub.s32 %s23, %s30
      %s159 = sor.u32 %s157, %s158
      %p160 = scmp.eq.s32.totalorder %s159, 0
      %s162 = sadd.s32 %s161, 1
      %s163 = scalar_select %p160, %s161, %s162
      %p166 = pneg %p160
      %p167 = scmp.eq.s32.totalorder %s15, 1
      %p168 = por %p166, %p167
      %p169 = scmp.ne.s32.totalorder %s161, %s164
      %p170 = scmp.eq.s32.totalorder %s15, 0
      %p171 = por %p169, %p170
      %p172 = scmp.ne.s32.totalorder %s161, %s164
      %p173 = scmp.eq.s32.totalorder %s20, 1
      %p174 = por %p172, %p173
      %p175 = scmp.ne.s32.totalorder %s164, %s165
      %p176 = scmp.eq.s32.totalorder %s20, 0
      %p177 = por %p175, %p176
      %p178 = scmp.ne.s32.totalorder %s164, %s165
      %p179 = scmp.eq.s32.totalorder %s21, 1
      %p180 = por %p178, %p179
      %p182 = scmp.ne.s32.totalorder %s165, %s181
      %p183 = scmp.eq.s32.totalorder %s21, 0
      %p184 = por %p182, %p183
      %p185 = scmp.le.s32.totalorder 1, %s15
      %p186 = scmp.lt.s32.totalorder %s15, 3
      %p187 = pnand %p185, %p186
      %p188 = pneg %p187
      // Predicated region
      $region9: #{encoder_layer_forward.4} parent=5 // pred_check
        _
      $region10: #{encoder_layer_forward.4} parent=5 // pred_check_branch
        %190 = sbr.rel (%p187) target = $region12
      $region11: #{encoder_layer_forward.4} parent=5 // pred_region
        %s191 = ssub.s32 %s15, 1
        // Predicated region
        $region13: #{encoder_layer_forward.4} parent=11 // pred_check
          %p192 = pneg %p128
        $region14: #{encoder_layer_forward.4} parent=11 // pred_check_branch
          %194 = sbr.rel (%p192) target = $region16
        $region15: #{encoder_layer_forward.4} parent=11 // pred_region
          %196 = vsyncadd [#allocation6], 0
          %s197 = sshll.u32 %s3, 4
          %s198 = int_to_ptr.hbm [resolvable:$true] %s197
          %s199 = sshll.u32 [#allocation5], 4
          %s200 = int_to_ptr.vmem [resolvable:$true] %s199
          %205 = dma.hbm_to_vmem [thread:$0]  %s198, 4096, %s200, [#allocation6], 128, 128, 8
        $region16: #{encoder_layer_forward.4} parent=11 // pred_fallthru
          _
        // Predicated region
        $region17: #{encoder_layer_forward.4} parent=11 // pred_check
          %p206 = pneg %p149
        $region18: #{encoder_layer_forward.4} parent=11 // pred_check_branch
          %208 = sbr.rel (%p206) target = $region20
        $region19: #{encoder_layer_forward.4} parent=11 // pred_region
          _
        $region20: #{encoder_layer_forward.4} parent=11 // pred_fallthru
          _
      $region12: #{encoder_layer_forward.4} parent=5 // pred_fallthru
        _
      %p209 = scmp.lt.s32.totalorder %s15, 2
      // Predicated region
      $region21: #{encoder_layer_forward.4} parent=5 // pred_check
        %p210 = pneg %p209
      $region22: #{encoder_layer_forward.4} parent=5 // pred_check_branch
        %212 = sbr.rel (%p210) target = $region24
      $region23: #{encoder_layer_forward.4} parent=5 // pred_region
        // Predicated region
        $region25: #{encoder_layer_forward.4} parent=23 // pred_check
          %p213 = pneg %p47
        $region26: #{encoder_layer_forward.4} parent=23 // pred_check_branch
          %215 = sbr.rel (%p213) target = $region28
        $region27: #{encoder_layer_forward.4} parent=23 // pred_region
          %p216 = scmp.lt.s32.totalorder %s22, 1
          %s217 = scalar_select %p216, %s22, 1
          %s218 = smul.addr %s217, 6
          %s219 = smul.addr %s218, 4
          %s220 = scalar_lea.vmem %s0, %s219
        $region28: #{encoder_layer_forward.4} parent=23 // pred_fallthru
          _
        // Predicated region
        $region29: #{encoder_layer_forward.4} parent=23 // pred_check
          %p221 = pneg %p73
        $region30: #{encoder_layer_forward.4} parent=23 // pred_check_branch
          %223 = sbr.rel (%p221) target = $region32
        $region31: #{encoder_layer_forward.4} parent=23 // pred_region
          %p224 = scmp.lt.s32.totalorder %s22, 1
          %s225 = scalar_select %p224, %s22, 1
          %s226 = scalar_lea.vmem %s1, %s225
        $region32: #{encoder_layer_forward.4} parent=23 // pred_fallthru
          _
        // Predicated region
        $region33: #{encoder_layer_forward.4} parent=23 // pred_check
          %p227 = pneg %p101
        $region34: #{encoder_layer_forward.4} parent=23 // pred_check_branch
          %229 = sbr.rel (%p227) target = $region36
        $region35: #{encoder_layer_forward.4} parent=23 // pred_region
          %s230 = sand.u32 %s91, 1
          %s231 = scalar_lea.sflag [#allocation4], %s230
          %s232 = sand.u32 %s91, 1
          %s233 = smul.addr %s232, 16
          %s234 = scalar_lea.vmem [#allocation3], %s233
          %236 = vsyncadd %s231, 0
          %s237 = smul.addr %s23, 2
          %s238 = smul.addr %s22, 2
          %s239 = sadd.s32 %s237, %s238
          %s240 = smul.addr %s239, 8
          %s241 = scalar_lea.hbm %s2, %s240
          %s243 = sshll.u32 %s241, 4
          %s244 = int_to_ptr.hbm [resolvable:$true] %s243
          %s245 = sshll.u32 %s234, 4
          %s246 = int_to_ptr.vmem [resolvable:$true] %s245
          %248 = dma.hbm_to_vmem [thread:$0]  %s244, 256, %s246, %s231
        $region36: #{encoder_layer_forward.4} parent=23 // pred_fallthru
          _
      $region24: #{encoder_layer_forward.4} parent=5 // pred_fallthru
        _
      %p249 = scmp.le.s32.totalorder 1, %s15
      %p250 = scmp.lt.s32.totalorder %s15, 3
      %p251 = pnand %p249, %p250
      %p252 = pneg %p251
      // Predicated region
      $region37: #{encoder_layer_forward.4} parent=5 // pred_check
        _
      $region38: #{encoder_layer_forward.4} parent=5 // pred_check_branch
        %254 = sbr.rel (%p251) target = $region40
      $region39: #{encoder_layer_forward.4} parent=5 // pred_region
        %s255 = ssub.s32 %s15, 1
        %s256 = sand.u32 %s94, 1
        %s257 = scalar_lea.sflag [#allocation4], %s256
        %s258 = sand.u32 %s94, 1
        %s259 = smul.addr %s258, 16
        %s260 = scalar_lea.vmem [#allocation3], %s259
        // Predicated region
        $region41: #{encoder_layer_forward.4} parent=39 // pred_check
          %p261 = pneg %p107
        $region42: #{encoder_layer_forward.4} parent=39 // pred_check_branch
          %263 = sbr.rel (%p261) target = $region44
        $region43: #{encoder_layer_forward.4} parent=39 // pred_region
          %265 = dma.done %s257, 256
        $region44: #{encoder_layer_forward.4} parent=39 // pred_fallthru
          _
        // Predicated region
        $region45: #{encoder_layer_forward.4} parent=39 // pred_check
          %p266 = pneg %p128
        $region46: #{encoder_layer_forward.4} parent=39 // pred_check_branch
          %268 = sbr.rel (%p266) target = $region48
        $region47: #{encoder_layer_forward.4} parent=39 // pred_region
          %270 = dma.done [#allocation6], 4096
        $region48: #{encoder_layer_forward.4} parent=39 // pred_fallthru
          _
        %p271 = scmp.lt.s32.totalorder %s24, 1
        %s272 = scalar_select %p271, %s24, 1
        %s273 = smul.addr %s272, 6
        %s274 = smul.addr %s273, 4
        %s275 = scalar_lea.vmem %s0, %s274
        %p276 = pneg %p53
        %p277 = pneg %p50
        %p278 = scmp.lt.s32.totalorder %s24, 1
        %s279 = scalar_select %p278, %s24, 1
        %s280 = scalar_lea.vmem %s1, %s279
        %p281 = pneg %p79
        %p282 = pneg %p76
        %s283 = sand.u32 %s94, 1
        %s284 = scalar_lea.sflag [#allocation4], %s283
        %s285 = sand.u32 %s94, 1
        %s286 = smul.addr %s285, 16
        %s287 = scalar_lea.vmem [#allocation3], %s286
        %p288 = pneg %p107
        %p289 = pneg %p104
        %p290 = pneg %p128
        %p291 = pneg %p125
        %p292 = pneg %p149
        %p293 = pneg %p146
        %p294 = pneg %p177
        %p295 = pneg %p174
        %p296 = scmp.lt.s32.totalorder %s24, 1
        %s297 = scalar_select %p296, %s24, 1
        %p298 = scmp.lt.s32.totalorder %s25, 0
        %s299 = scalar_select %p298, %s25, 0
        %s300 = smul.addr %s299, 2
        %s301 = smul.addr %s297, 2
        %s302 = sadd.s32 %s300, %s301
        %s303 = smul.addr %s302, 4
        %s304 = scalar_lea.vmem %s5, %s303
        %p305 = scmp.lt.s32.totalorder %s24, 1
        %s306 = scalar_select %p305, %s24, 1
        %s307 = smul.addr %s306, 6
        %s308 = smul.addr %s307, 4
        %s309 = scalar_lea.vmem %s0, %s308
        %p310 = scmp.lt.s32.totalorder %s24, 1
        %s311 = scalar_select %p310, %s24, 1
        %s312 = scalar_lea.vmem %s1, %s311
        %p313 = scmp.lt.s32.totalorder %s24, 1
        %s314 = scalar_select %p313, %s24, 1
        %p315 = scmp.lt.s32.totalorder %s25, 0
        %s316 = scalar_select %p315, %s25, 0
        %s317 = smul.addr %s316, 2
        %s318 = smul.addr %s314, 2
        %s319 = sadd.s32 %s317, %s318
        %s320 = smul.addr %s319, 4
        %s321 = scalar_lea.vmem %s5, %s320
        %s323 = smul.u32 %s25, 8
        %s324 = sshra.s32 %s323, 3
        %s325 = sand.u32 %s323, 7
        %s326 = smul.u32 %s324, 6
        %s327 = smul.addr %s326, 4
        %s328 = scalar_lea.vmem %s309, %s327
        %v329 = vld [vmem:[%s328] sm:$0xff]
        %v330 = vld [vmem:[%s309 + $0x8] sm:$0xff]
        %v331 = vld [vmem:[%s309 + $0x10] sm:$0xff]
        %v332 = vld [vmem:[%s312] sm:$0x1]
        %vm333 = vcmp.gt.f32.partialorder %v332, 0.0
        %v334 = vsel %vm333, 0.0, -1e+09
        %v336 = vperm.slane %v334, 0
        %338 = vmatpush.bf16.xpose.msra.mxu0 0
        %339 = vmatpush.bf16.xpose.msra.mxu0 0
        %340 = vmatpush.bf16.xpose.msra.mxu0 0
        %341 = vmatpush.bf16.xpose.msra.mxu0 0
        %342 = vmatpush.bf16.xpose.msra.mxu0 0
        %343 = vmatpush.bf16.xpose.msra.mxu0 0
        %344 = vmatpush.bf16.xpose.msra.mxu0 0
        %345 = vmatpush.bf16.xpose.msra.mxu0 %v330
        %346 = vmatmul.bf16.gmra.mxu0 %v329
        %v347 = vpop.f32.mrf.mxu0
        %v348 = vadd.f32 %v336, %v347
        %v349 = vpop.f32.mrf.mxu0
        %350 = vdwg.mxu0
        %vm351 = vcmask 64512
        %v352 = vsel %vm351, %v348, -inf
        %353 = vmax.xlane.f32.xlu0 %v352
        %v354 = vpop.xlane.xlu0 %353
        %v355 = vsub.f32 %v348, %v354
        %v356 = vmul.f32 %v355, 1.442695
        %v357 = vpow.pop %v356
        %v358 = vsel %vm351, %v357, 0.0
        %359 = vadd.xlane.f32.xlu0 %v358
        %v360 = vpop.xlane.xlu0 %359
        %v361 = vrcp.pop %v360
        %v362 = vmul.f32 %v357, %v361
        %v363 = vpack.c.bf16 %v362, %v362
        %v365 = vsel %vm351, %v363, 0
        %vm367 = vcmask 1043456
        %v369 = vsel %vm367, %v331, 0
        %371 = vmatpush.bf16.msra.mxu0 0
        %372 = vmatpush.bf16.msra.mxu0 0
        %373 = vmatpush.bf16.msra.mxu0 0
        %374 = vmatpush.bf16.msra.mxu0 0
        %375 = vmatpush.bf16.msra.mxu0 0
        %376 = vmatpush.bf16.msra.mxu0 0
        %377 = vmatpush.bf16.msra.mxu0 0
        %378 = vmatpush.bf16.msra.mxu0 %v369
        %379 = vmatmul.bf16.gmra.mxu0 %v365
        %v380 = vpop.f32.mrf.mxu0
        %v381 = vadd.f32 0.0, %v380
        %v382 = vpop.f32.mrf.mxu0
        %383 = vdwg.mxu0
        %v384 = vpack.c.bf16 %v381, %v381
        %385 = vst [vmem:[#allocation2] sm:$0xf] %v384
        %v387 = vunpack.c.h.b16 %v329
        %v388 = vpack.c.b16 %v387, %v387
        %v391 = vunpack.c.h.b16 %v330
        %v392 = vpack.c.b16 %v391, %v391
        %394 = vmatpush.bf16.xpose.msra.mxu0 0
        %395 = vmatpush.bf16.xpose.msra.mxu0 0
        %396 = vmatpush.bf16.xpose.msra.mxu0 0
        %397 = vmatpush.bf16.xpose.msra.mxu0 0
        %398 = vmatpush.bf16.xpose.msra.mxu0 0
        %399 = vmatpush.bf16.xpose.msra.mxu0 0
        %400 = vmatpush.bf16.xpose.msra.mxu0 0
        %401 = vmatpush.bf16.xpose.msra.mxu0 %v392
        %402 = vmatmul.bf16.gmra.mxu0 %v388
        %v403 = vpop.f32.mrf.mxu0
        %v404 = vadd.f32 %v336, %v403
        %v405 = vpop.f32.mrf.mxu0
        %406 = vdwg.mxu0
        %v407 = vsel %vm351, %v404, -inf
        %408 = vmax.xlane.f32.xlu0 %v407
        %v409 = vpop.xlane.xlu0 %408
        %v410 = vsub.f32 %v404, %v409
        %v411 = vmul.f32 %v410, 1.442695
        %v412 = vpow.pop %v411
        %v413 = vsel %vm351, %v412, 0.0
        %414 = vadd.xlane.f32.xlu0 %v413
        %v415 = vpop.xlane.xlu0 %414
        %v416 = vrcp.pop %v415
        %v417 = vmul.f32 %v412, %v416
        %v418 = vpack.c.bf16 %v417, %v417
        %v420 = vunpack.c.h.b16 %v331
        %v421 = vpack.c.b16 %v420, %v420
        %v423 = vsel %vm351, %v418, 0
        %v426 = vsel %vm367, %v421, 0
        %428 = vmatpush.bf16.msra.mxu0 0
        %429 = vmatpush.bf16.msra.mxu0 0
        %430 = vmatpush.bf16.msra.mxu0 0
        %431 = vmatpush.bf16.msra.mxu0 0
        %432 = vmatpush.bf16.msra.mxu0 0
        %433 = vmatpush.bf16.msra.mxu0 0
        %434 = vmatpush.bf16.msra.mxu0 0
        %435 = vmatpush.bf16.msra.mxu0 %v426
        %436 = vmatmul.bf16.gmra.mxu0 %v423
        %v437 = vpop.f32.mrf.mxu0
        %v438 = vadd.f32 0.0, %v437
        %v439 = vpop.f32.mrf.mxu0
        %440 = vdwg.mxu0
        %v441 = vpack.c.bf16 %v438, %v438
        %442 = vst [vmem:[#allocation2 + $0x4] sm:$0xf] %v441
        %v443 = vld [vmem:[#allocation2] sm:$0xff]
        %v444 = vld [vmem:[#allocation5] sm:$0xff]
        %v445 = vld [vmem:[#allocation5 + $0x8] sm:$0xff]
        %v446 = vld [vmem:[#allocation5 + $0x10] sm:$0xff]
        %v447 = vld [vmem:[#allocation5 + $0x18] sm:$0xff]
        %v448 = vld [vmem:[#allocation5 + $0x20] sm:$0xff]
        %v449 = vld [vmem:[#allocation5 + $0x28] sm:$0xff]
        %v450 = vld [vmem:[#allocation5 + $0x30] sm:$0xff]
        %v451 = vld [vmem:[#allocation5 + $0x38] sm:$0xff]
        %v452 = vld [vmem:[#allocation5 + $0x40] sm:$0xff]
        %v453 = vld [vmem:[#allocation5 + $0x48] sm:$0xff]
        %v454 = vld [vmem:[#allocation5 + $0x50] sm:$0xff]
        %v455 = vld [vmem:[#allocation5 + $0x58] sm:$0xff]
        %v456 = vld [vmem:[#allocation5 + $0x60] sm:$0xff]
        %v457 = vld [vmem:[#allocation5 + $0x68] sm:$0xff]
        %v458 = vld [vmem:[#allocation5 + $0x70] sm:$0xff]
        %v459 = vld [vmem:[#allocation5 + $0x78] sm:$0xff]
        %v460 = vld [vmem:[#allocation5 + $0x80] sm:$0xff]
        %v461 = vld [vmem:[#allocation5 + $0x88] sm:$0xff]
        %v462 = vld [vmem:[#allocation5 + $0x90] sm:$0xff]
        %v463 = vld [vmem:[#allocation5 + $0x98] sm:$0xff]
        %v464 = vld [vmem:[#allocation5 + $0xa0] sm:$0xff]
        %v465 = vld [vmem:[#allocation5 + $0xa8] sm:$0xff]
        %v466 = vld [vmem:[#allocation5 + $0xb0] sm:$0xff]
        %v467 = vld [vmem:[#allocation5 + $0xb8] sm:$0xff]
        %v468 = vld [vmem:[#allocation5 + $0xc0] sm:$0xff]
        %v469 = vld [vmem:[#allocation5 + $0xc8] sm:$0xff]
        %v470 = vld [vmem:[#allocation5 + $0xd0] sm:$0xff]
        %v471 = vld [vmem:[#allocation5 + $0xd8] sm:$0xff]
        %v472 = vld [vmem:[#allocation5 + $0xe0] sm:$0xff]
        %v473 = vld [vmem:[#allocation5 + $0xe8] sm:$0xff]
        %v474 = vld [vmem:[#allocation5 + $0xf0] sm:$0xff]
        %v475 = vld [vmem:[#allocation5 + $0xf8] sm:$0xff]
        %v476 = vld [vmem:[%s4] sm:$0x3]
        %v478 = vperm.slane %v476, 0
        %v479 = vperm.slane %v476, 1
        %v483 = vunpack.c.l.b16 %v443
        %v484 = vunpack.c.h.b16 %v443
        %v485 = vpack.c.b16 %v483, %v483
        %v486 = vpack.c.b16 %v484, %v484
        %v521 = vunpack.c.l.b16 %v444
        %v522 = vunpack.c.h.b16 %v444
        %v523 = vunpack.c.l.b16 %v445
        %v524 = vunpack.c.h.b16 %v445
        %v525 = vunpack.c.l.b16 %v446
        %v526 = vunpack.c.h.b16 %v446
        %v527 = vunpack.c.l.b16 %v447
        %v528 = vunpack.c.h.b16 %v447
        %v529 = vunpack.c.l.b16 %v448
        %v530 = vunpack.c.h.b16 %v448
        %v531 = vunpack.c.l.b16 %v449
        %v532 = vunpack.c.h.b16 %v449
        %v533 = vunpack.c.l.b16 %v450
        %v534 = vunpack.c.h.b16 %v450
        %v535 = vunpack.c.l.b16 %v451
        %v536 = vunpack.c.h.b16 %v451
        %v537 = vunpack.c.l.b16 %v452
        %v538 = vunpack.c.h.b16 %v452
        %v539 = vunpack.c.l.b16 %v453
        %v540 = vunpack.c.h.b16 %v453
        %v541 = vunpack.c.l.b16 %v454
        %v542 = vunpack.c.h.b16 %v454
        %v543 = vunpack.c.l.b16 %v455
        %v544 = vunpack.c.h.b16 %v455
        %v545 = vunpack.c.l.b16 %v456
        %v546 = vunpack.c.h.b16 %v456
        %v547 = vunpack.c.l.b16 %v457
        %v548 = vunpack.c.h.b16 %v457
        %v549 = vunpack.c.l.b16 %v458
        %v550 = vunpack.c.h.b16 %v458
        %v551 = vunpack.c.l.b16 %v459
        %v552 = vunpack.c.h.b16 %v459
        %v553 = vunpack.c.l.b16 %v460
        %v554 = vunpack.c.h.b16 %v460
        %v555 = vunpack.c.l.b16 %v461
        %v556 = vunpack.c.h.b16 %v461
        %v557 = vunpack.c.l.b16 %v462
        %v558 = vunpack.c.h.b16 %v462
        %v559 = vunpack.c.l.b16 %v463
        %v560 = vunpack.c.h.b16 %v463
        %v561 = vunpack.c.l.b16 %v464
        %v562 = vunpack.c.h.b16 %v464
        %v563 = vunpack.c.l.b16 %v465
        %v564 = vunpack.c.h.b16 %v465
        %v565 = vunpack.c.l.b16 %v466
        %v566 = vunpack.c.h.b16 %v466
        %v567 = vunpack.c.l.b16 %v467
        %v568 = vunpack.c.h.b16 %v467
        %v569 = vunpack.c.l.b16 %v468
        %v570 = vunpack.c.h.b16 %v468
        %v571 = vunpack.c.l.b16 %v469
        %v572 = vunpack.c.h.b16 %v469
        %v573 = vunpack.c.l.b16 %v470
        %v574 = vunpack.c.h.b16 %v470
        %v575 = vunpack.c.l.b16 %v471
        %v576 = vunpack.c.h.b16 %v471
        %v577 = vunpack.c.l.b16 %v472
        %v578 = vunpack.c.h.b16 %v472
        %v579 = vunpack.c.l.b16 %v473
        %v580 = vunpack.c.h.b16 %v473
        %v581 = vunpack.c.l.b16 %v474
        %v582 = vunpack.c.h.b16 %v474
        %v583 = vunpack.c.l.b16 %v475
        %v584 = vunpack.c.h.b16 %v475
        %v585 = vpack.c.b16 %v523, %v521
        %v586 = vpack.c.b16 %v524, %v522
        %v587 = vpack.c.b16 %v527, %v525
        %v588 = vpack.c.b16 %v528, %v526
        %v589 = vpack.c.b16 %v531, %v529
        %v590 = vpack.c.b16 %v532, %v530
        %v591 = vpack.c.b16 %v535, %v533
        %v592 = vpack.c.b16 %v536, %v534
        %v593 = vpack.c.b16 %v539, %v537
        %v594 = vpack.c.b16 %v540, %v538
        %v595 = vpack.c.b16 %v543, %v541
        %v596 = vpack.c.b16 %v544, %v542
        %v597 = vpack.c.b16 %v547, %v545
        %v598 = vpack.c.b16 %v548, %v546
        %v599 = vpack.c.b16 %v551, %v549
        %v600 = vpack.c.b16 %v552, %v550
        %v601 = vpack.c.b16 %v555, %v553
        %v602 = vpack.c.b16 %v556, %v554
        %v603 = vpack.c.b16 %v559, %v557
        %v604 = vpack.c.b16 %v560, %v558
        %v605 = vpack.c.b16 %v563, %v561
        %v606 = vpack.c.b16 %v564, %v562
        %v607 = vpack.c.b16 %v567, %v565
        %v608 = vpack.c.b16 %v568, %v566
        %v609 = vpack.c.b16 %v571, %v569
        %v610 = vpack.c.b16 %v572, %v570
        %v611 = vpack.c.b16 %v575, %v573
        %v612 = vpack.c.b16 %v576, %v574
        %v613 = vpack.c.b16 %v579, %v577
        %v614 = vpack.c.b16 %v580, %v578
        %v615 = vpack.c.b16 %v583, %v581
        %v616 = vpack.c.b16 %v584, %v582
        %649 = vmatpush.bf16.msra.mxu0 %v599
        %650 = vmatpush.bf16.msra.mxu0 %v597
        %651 = vmatpush.bf16.msra.mxu0 %v595
        %652 = vmatpush.bf16.msra.mxu0 %v593
        %653 = vmatpush.bf16.msra.mxu0 %v591
        %654 = vmatpush.bf16.msra.mxu0 %v589
        %655 = vmatpush.bf16.msra.mxu0 %v587
        %656 = vmatpush.bf16.msra.mxu0 %v585
        %657 = vmatmul.bf16.gmra.mxu0 %v485
        %v658 = vpop.f32.mrf.mxu0
        %v659 = vadd.f32 %v478, %v658
        %v660 = vpop.f32.mrf.mxu0
        %661 = vdwg.mxu0
        %662 = vmatpush.bf16.msra.mxu0 %v615
        %663 = vmatpush.bf16.msra.mxu0 %v613
        %664 = vmatpush.bf16.msra.mxu0 %v611
        %665 = vmatpush.bf16.msra.mxu0 %v609
        %666 = vmatpush.bf16.msra.mxu0 %v607
        %667 = vmatpush.bf16.msra.mxu0 %v605
        %668 = vmatpush.bf16.msra.mxu0 %v603
        %669 = vmatpush.bf16.msra.mxu0 %v601
        %670 = vmatmul.bf16.gmra.mxu0 %v486
        %v671 = vpop.f32.mrf.mxu0
        %v672 = vadd.f32 %v659, %v671
        %v673 = vpop.f32.mrf.mxu0
        %674 = vdwg.mxu0
        %675 = vmatpush.bf16.msra.mxu0 %v600
        %676 = vmatpush.bf16.msra.mxu0 %v598
        %677 = vmatpush.bf16.msra.mxu0 %v596
        %678 = vmatpush.bf16.msra.mxu0 %v594
        %679 = vmatpush.bf16.msra.mxu0 %v592
        %680 = vmatpush.bf16.msra.mxu0 %v590
        %681 = vmatpush.bf16.msra.mxu0 %v588
        %682 = vmatpush.bf16.msra.mxu0 %v586
        %683 = vmatmul.bf16.gmra.mxu0 %v485
        %v684 = vpop.f32.mrf.mxu0
        %v685 = vadd.f32 %v479, %v684
        %v686 = vpop.f32.mrf.mxu0
        %687 = vdwg.mxu0
        %688 = vmatpush.bf16.msra.mxu0 %v616
        %689 = vmatpush.bf16.msra.mxu0 %v614
        %690 = vmatpush.bf16.msra.mxu0 %v612
        %691 = vmatpush.bf16.msra.mxu0 %v610
        %692 = vmatpush.bf16.msra.mxu0 %v608
        %693 = vmatpush.bf16.msra.mxu0 %v606
        %694 = vmatpush.bf16.msra.mxu0 %v604
        %695 = vmatpush.bf16.msra.mxu0 %v602
        %696 = vmatmul.bf16.gmra.mxu0 %v486
        %v697 = vpop.f32.mrf.mxu0
        %v698 = vadd.f32 %v685, %v697
        %v699 = vpop.f32.mrf.mxu0
        %700 = vdwg.mxu0
        %v701 = vld [vmem:[%s260] sm:$0xff]
        %v702 = vld [vmem:[%s260 + $0x8] sm:$0xff]
        %v703 = vadd.f32 %v701, %v672
        %v704 = vadd.f32 %v702, %v698
        %v705 = vpack.c.bf16 %v704, %v703
        %706 = vst [vmem:[%s321] sm:$0xff] %v705
        %p707 = scmp.lt.s32.totalorder %s24, 1
        %s708 = scalar_select %p707, %s24, 1
        %p709 = scmp.lt.s32.totalorder %s25, 0
        %s710 = scalar_select %p709, %s25, 0
        %s711 = smul.addr %s710, 2
        %s712 = smul.addr %s708, 2
        %s713 = sadd.s32 %s711, %s712
        %s714 = smul.addr %s713, 4
        %s715 = scalar_lea.vmem %s5, %s714
        // Predicated region
        $region49: #{encoder_layer_forward.4} parent=39 // pred_check
          %p716 = pneg %p174
        $region50: #{encoder_layer_forward.4} parent=39 // pred_check_branch
          %718 = sbr.rel (%p716) target = $region52
        $region51: #{encoder_layer_forward.4} parent=39 // pred_region
          _
        $region52: #{encoder_layer_forward.4} parent=39 // pred_fallthru
          _
      $region40: #{encoder_layer_forward.4} parent=5 // pred_fallthru
        _
      %p719 = scmp.le.s32.totalorder 2, %s15
      // Predicated region
      $region53: #{encoder_layer_forward.4} parent=5 // pred_check
        %p720 = pneg %p719
      $region54: #{encoder_layer_forward.4} parent=5 // pred_check_branch
        %722 = sbr.rel (%p720) target = $region56
      $region55: #{encoder_layer_forward.4} parent=5 // pred_region
        %s723 = ssub.s32 %s15, 2
        // Predicated region
        $region57: #{encoder_layer_forward.4} parent=55 // pred_check
          %p724 = pneg %p180
        $region58: #{encoder_layer_forward.4} parent=55 // pred_check_branch
          %726 = sbr.rel (%p724) target = $region60
        $region59: #{encoder_layer_forward.4} parent=55 // pred_region
          %p727 = scmp.lt.s32.totalorder %s26, 1
          %s728 = scalar_select %p727, %s26, 1
          %p729 = scmp.lt.s32.totalorder %s27, 0
          %s730 = scalar_select %p729, %s27, 0
          %s731 = smul.addr %s730, 2
          %s732 = smul.addr %s728, 2
          %s733 = sadd.s32 %s731, %s732
          %s734 = smul.addr %s733, 4
          %s735 = scalar_lea.vmem %s5, %s734
        $region60: #{encoder_layer_forward.4} parent=55 // pred_fallthru
          _
      $region56: #{encoder_layer_forward.4} parent=5 // pred_fallthru
        _
    $region6: #{encoder_layer_forward.4} parent=1 // loop_footer
      %s19 = sadd.s32 1, %s15
    $region7: #{encoder_layer_forward.4} parent=1 // loop_footer_branch
      %14 = sbr.rel target = $region3
    $region8: #{encoder_layer_forward.4} parent=1 // loop_exit
      _
    %736 = vsyncpa [#allocation4], 1
    %s737 = scalar_lea.sflag [#allocation4], 1
    %738 = vsyncpa %s737, 1
    %739 = vsyncpa [#allocation6], 1

// kernel: encoder_layer_forward.3
$region0: #{encoder_layer_forward.3}
  #allocation0 [shape = 'u32[]', space=smem, size = 0x4, offset = 0x4, fixed_abs, tag = 'smem constant byte address 0x4 - core index']
  #allocation1 [shape = 'u32[72,128]{1,0:T(1,128)}', space=vmem, size = 0x9000, scoped, tag = 'internal scratch']
  %s0 = inlined_call_operand.hbm [shape: f32[16,256], index: 0, kind: input, shape index: {}]
  %s1 = inlined_call_operand.vmem [shape: f32[1,256], index: 1, kind: input, shape index: {}]
  %s2 = inlined_call_operand.vmem [shape: f32[1,256], index: 2, kind: input, shape index: {}]
  %s3 = inlined_call_operand.hbm [shape: bf16[256,768], index: 3, kind: input, shape index: {}]
  %s4 = inlined_call_operand.vmem [shape: f32[1,768], index: 4, kind: input, shape index: {}]
  %s5 = inlined_call_operand.vmem [shape: bf16[16,768], index: 5, kind: output, shape index: {}]
  %s6 = sld [smem:[#allocation0]]
  $region38: #{encoder_layer_forward.3} parent=0
    _
  %s8 = ssub.s32 1, %s6
  %s9 = scalar_select 0, %s8, %s6
  $region1: #{encoder_layer_forward.3} parent=0
    #allocation2 [shape = 'u8[16384]{0}', space=vmem, size = 0x4000, scoped, tag = 'input window, operand 0, single buffered']
    #allocation3 [shape = 's32[1]{0}', space=sflag, size = 0x4, scoped, tag = 'scoped memory for encoder_layer_forward.3']
    #allocation4 [shape = 'u8[393216]{0}', space=vmem, size = 0x60000, scoped, tag = 'input window, operand 3, single buffered']
    #allocation5 [shape = 's32[1]{0}', space=sflag, size = 0x4, scoped, tag = 'scoped memory for encoder_layer_forward.3']
    %10 = vsyncpa [#allocation3], 0
    %11 = vsyncpa [#allocation5], 0
    // Predicated region
    $region2: #{encoder_layer_forward.3} parent=1 // pred_check
      _
    $region3: #{encoder_layer_forward.3} parent=1 // pred_check_branch
      %13 = sbr.rel (0) target = $region5
    $region4: #{encoder_layer_forward.3} parent=1 // pred_region
      %15 = vsyncadd [#allocation3], 0
      %s16 = sshll.u32 %s0, 4
      %s17 = int_to_ptr.hbm [resolvable:$true] %s16
      %s18 = sshll.u32 [#allocation2], 4
      %s19 = int_to_ptr.vmem [resolvable:$true] %s18
      %24 = dma.hbm_to_vmem [thread:$0]  %s17, 512, %s19, [#allocation3], 256, 256, 16
    $region5: #{encoder_layer_forward.3} parent=1 // pred_fallthru
      _
    // Predicated region
    $region6: #{encoder_layer_forward.3} parent=1 // pred_check
      _
    $region7: #{encoder_layer_forward.3} parent=1 // pred_check_branch
      %26 = sbr.rel (0) target = $region9
    $region8: #{encoder_layer_forward.3} parent=1 // pred_region
      _
    $region9: #{encoder_layer_forward.3} parent=1 // pred_fallthru
      _
    // Predicated region
    $region10: #{encoder_layer_forward.3} parent=1 // pred_check
      _
    $region11: #{encoder_layer_forward.3} parent=1 // pred_check_branch
      %28 = sbr.rel (0) target = $region13
    $region12: #{encoder_layer_forward.3} parent=1 // pred_region
      _
    $region13: #{encoder_layer_forward.3} parent=1 // pred_fallthru
      _
    // Predicated region
    $region14: #{encoder_layer_forward.3} parent=1 // pred_check
      _
    $region15: #{encoder_layer_forward.3} parent=1 // pred_check_branch
      %30 = sbr.rel (0) target = $region17
    $region16: #{encoder_layer_forward.3} parent=1 // pred_region
      %32 = vsyncadd [#allocation5], 0
      %s33 = sshll.u32 %s3, 4
      %s34 = int_to_ptr.hbm [resolvable:$true] %s33
      %s35 = sshll.u32 [#allocation4], 4
      %s36 = int_to_ptr.vmem [resolvable:$true] %s35
      %41 = dma.hbm_to_vmem [thread:$0]  %s34, 12288, %s36, [#allocation5], 384, 384, 24
    $region17: #{encoder_layer_forward.3} parent=1 // pred_fallthru
      _
    // Predicated region
    $region18: #{encoder_layer_forward.3} parent=1 // pred_check
      _
    $region19: #{encoder_layer_forward.3} parent=1 // pred_check_branch
      %43 = sbr.rel (0) target = $region21
    $region20: #{encoder_layer_forward.3} parent=1 // pred_region
      _
    $region21: #{encoder_layer_forward.3} parent=1 // pred_fallthru
      _
    // Predicated region
    $region22: #{encoder_layer_forward.3} parent=1 // pred_check
      _
    $region23: #{encoder_layer_forward.3} parent=1 // pred_check_branch
      %45 = sbr.rel (0) target = $region25
    $region24: #{encoder_layer_forward.3} parent=1 // pred_region
      %47 = dma.done [#allocation3], 512
    $region25: #{encoder_layer_forward.3} parent=1 // pred_fallthru
      _
    // Predicated region
    $region26: #{encoder_layer_forward.3} parent=1 // pred_check
      _
    $region27: #{encoder_layer_forward.3} parent=1 // pred_check_branch
      %49 = sbr.rel (0) target = $region29
    $region28: #{encoder_layer_forward.3} parent=1 // pred_region
      %51 = dma.done [#allocation5], 12288
    $region29: #{encoder_layer_forward.3} parent=1 // pred_fallthru
      _
    %v52 = vld [vmem:[#allocation2] sm:$0xff]
    %v53 = vld [vmem:[#allocation2 + $0x8] sm:$0xff]
    %v54 = vld [vmem:[#allocation2 + $0x10] sm:$0xff]
    %v55 = vld [vmem:[#allocation2 + $0x18] sm:$0xff]
    %v56 = vld [vmem:[%s1] sm:$0x3]
    %v57 = vld [vmem:[%s2] sm:$0x3]
    %v58 = vadd.f32 %v52, %v53
    %59 = vadd.xlane.f32.xlu0 %v58
    %v60 = vpop.xlane.xlu0 %59
    %v61 = vadd.f32 %v54, %v55
    %62 = vadd.xlane.f32.xlu0 %v61
    %v63 = vpop.xlane.xlu0 %62
    %v64 = vrcp.pop 256.0
    %v65 = vmul.f32 256.0, %v64
    %v66 = vsub.f32 1.0, %v65
    %v67 = vmul.f32 %v64, %v66
    %v68 = vadd.f32 %v64, %v67
    %vm69 = vweird.f32 %v64
    %v70 = vsel %vm69, %v64, %v68
    %v71 = vmul.f32 %v60, %v70
    %v72 = vmul.f32 %v63, %v70
    %v73 = vsub.f32 %v52, %v71
    %v74 = vsub.f32 %v53, %v71
    %v75 = vsub.f32 %v54, %v72
    %v76 = vsub.f32 %v55, %v72
    %v77 = vmul.f32 %v73, %v73
    %v78 = vmul.f32 %v74, %v74
    %v79 = vmul.f32 %v75, %v75
    %v80 = vmul.f32 %v76, %v76
    %v81 = vadd.f32 %v77, %v78
    %82 = vadd.xlane.f32.xlu0 %v81
    %v83 = vpop.xlane.xlu0 %82
    %v84 = vadd.f32 %v79, %v80
    %85 = vadd.xlane.f32.xlu0 %v84
    %v86 = vpop.xlane.xlu0 %85
    %v87 = vrcp.pop 255.0
    %v88 = vmul.f32 255.0, %v87
    %v89 = vsub.f32 1.0, %v88
    %v90 = vmul.f32 %v87, %v89
    %v91 = vadd.f32 %v87, %v90
    %vm92 = vweird.f32 %v87
    %v93 = vsel %vm92, %v87, %v91
    %v94 = vmul.f32 %v83, %v93
    %v95 = vmul.f32 %v86, %v93
    %v96 = vrsqrt.pop %v94
    %v97 = vmul.f32 %v96, %v94
    %v98 = vmul.f32 %v97, %v96
    %v99 = vmul.f32 0.5, %v98
    %v100 = vsub.f32 1.5, %v99
    %v101 = vmul.f32 %v96, %v100
    %v102 = vmul.f32 %v94, %v101
    %vm103 = vcmp.eq.f32.partialorder %v94, inf
    %v104 = vsel %vm103, %v94, %v102
    %vm105 = vcmp.eq.f32.partialorder %v94, 0.0
    %v106 = vand.u32 %v94, 2147483648
    %v107 = vsel %vm105, %v106, %v104
    %v108 = vrsqrt.pop %v95
    %v109 = vmul.f32 %v108, %v95
    %v110 = vmul.f32 %v109, %v108
    %v111 = vmul.f32 0.5, %v110
    %v112 = vsub.f32 1.5, %v111
    %v113 = vmul.f32 %v108, %v112
    %v114 = vmul.f32 %v95, %v113
    %vm115 = vcmp.eq.f32.partialorder %v95, inf
    %v116 = vsel %vm115, %v95, %v114
    %vm117 = vcmp.eq.f32.partialorder %v95, 0.0
    %v118 = vand.u32 %v95, 2147483648
    %v119 = vsel %vm117, %v118, %v116
    %v120 = vadd.f32 %v107, 1e-06
    %v121 = vadd.f32 %v119, 1e-06
    %v122 = vrcp.pop %v120
    %v123 = vrcp.pop %v121
    %v124 = vmul.f32 %v73, %v122
    %v125 = vmul.f32 %v74, %v122
    %v126 = vmul.f32 %v75, %v123
    %v127 = vmul.f32 %v76, %v123
    %v129 = vperm.slane %v56, 0
    %v130 = vperm.slane %v56, 1
    %v133 = vmul.f32 %v124, %v129
    %v134 = vmul.f32 %v125, %v130
    %v135 = vmul.f32 %v126, %v129
    %v136 = vmul.f32 %v127, %v130
    %v138 = vperm.slane %v57, 0
    %v139 = vperm.slane %v57, 1
    %v142 = vadd.f32 %v133, %v138
    %v143 = vadd.f32 %v134, %v139
    %v144 = vadd.f32 %v135, %v138
    %v145 = vadd.f32 %v136, %v139
    %v146 = vpack.c.bf16 %v144, %v142
    %v147 = vpack.c.bf16 %v145, %v143
    %v148 = vld [vmem:[#allocation4] sm:$0xff]
    %v149 = vld [vmem:[#allocation4 + $0x8] sm:$0xff]
    %v150 = vld [vmem:[#allocation4 + $0x10] sm:$0xff]
    %v151 = vld [vmem:[#allocation4 + $0x18] sm:$0xff]
    %v152 = vld [vmem:[#allocation4 + $0x20] sm:$0xff]
    %v153 = vld [vmem:[#allocation4 + $0x28] sm:$0xff]
    %v154 = vld [vmem:[#allocation4 + $0x30] sm:$0xff]
    %v155 = vld [vmem:[#allocation4 + $0x38] sm:$0xff]
    %v156 = vld [vmem:[#allocation4 + $0x40] sm:$0xff]
    %v157 = vld [vmem:[#allocation4 + $0x48] sm:$0xff]
    %v158 = vld [vmem:[#allocation4 + $0x50] sm:$0xff]
    %v159 = vld [vmem:[#allocation4 + $0x58] sm:$0xff]
    %v160 = vld [vmem:[#allocation4 + $0x60] sm:$0xff]
    %v161 = vld [vmem:[#allocation4 + $0x68] sm:$0xff]
    %v162 = vld [vmem:[#allocation4 + $0x70] sm:$0xff]
    %v163 = vld [vmem:[#allocation4 + $0x78] sm:$0xff]
    %v164 = vld [vmem:[#allocation4 + $0x80] sm:$0xff]
    %v165 = vld [vmem:[#allocation4 + $0x88] sm:$0xff]
    %v166 = vld [vmem:[#allocation4 + $0x90] sm:$0xff]
    %v167 = vld [vmem:[#allocation4 + $0x98] sm:$0xff]
    %v168 = vld [vmem:[#allocation4 + $0xa0] sm:$0xff]
    %v169 = vld [vmem:[#allocation4 + $0xa8] sm:$0xff]
    %v170 = vld [vmem:[#allocation4 + $0xb0] sm:$0xff]
    %v171 = vld [vmem:[#allocation4 + $0xb8] sm:$0xff]
    %v172 = vld [vmem:[#allocation4 + $0xc0] sm:$0xff]
    %v173 = vld [vmem:[#allocation4 + $0xc8] sm:$0xff]
    %v174 = vld [vmem:[#allocation4 + $0xd0] sm:$0xff]
    %v175 = vld [vmem:[#allocation4 + $0xd8] sm:$0xff]
    %v176 = vld [vmem:[#allocation4 + $0xe0] sm:$0xff]
    %v177 = vld [vmem:[#allocation4 + $0xe8] sm:$0xff]
    %v178 = vld [vmem:[#allocation4 + $0xf0] sm:$0xff]
    %v179 = vld [vmem:[#allocation4 + $0xf8] sm:$0xff]
    %v180 = vld [vmem:[#allocation4 + $0x100] sm:$0xff]
    %v181 = vld [vmem:[#allocation4 + $0x108] sm:$0xff]
    %v182 = vld [vmem:[#allocation4 + $0x110] sm:$0xff]
    %v183 = vld [vmem:[#allocation4 + $0x118] sm:$0xff]
    %v184 = vld [vmem:[#allocation4 + $0x120] sm:$0xff]
    %v185 = vld [vmem:[#allocation4 + $0x128] sm:$0xff]
    %v186 = vld [vmem:[#allocation4 + $0x130] sm:$0xff]
    %v187 = vld [vmem:[#allocation4 + $0x138] sm:$0xff]
    %v188 = vld [vmem:[#allocation4 + $0x140] sm:$0xff]
    %v189 = vld [vmem:[#allocation4 + $0x148] sm:$0xff]
    %v190 = vld [vmem:[#allocation4 + $0x150] sm:$0xff]
    %v191 = vld [vmem:[#allocation4 + $0x158] sm:$0xff]
    %v192 = vld [vmem:[#allocation4 + $0x160] sm:$0xff]
    %v193 = vld [vmem:[#allocation4 + $0x168] sm:$0xff]
    %v194 = vld [vmem:[#allocation4 + $0x170] sm:$0xff]
    %v195 = vld [vmem:[#allocation4 + $0x178] sm:$0xff]
    %v196 = vld [vmem:[#allocation4 + $0x180] sm:$0xff]
    %v197 = vld [vmem:[#allocation4 + $0x188] sm:$0xff]
    %v198 = vld [vmem:[#allocation4 + $0x190] sm:$0xff]
    %v199 = vld [vmem:[#allocation4 + $0x198] sm:$0xff]
    %v200 = vld [vmem:[#allocation4 + $0x1a0] sm:$0xff]
    %v201 = vld [vmem:[#allocation4 + $0x1a8] sm:$0xff]
    %v202 = vld [vmem:[#allocation4 + $0x1b0] sm:$0xff]
    %v203 = vld [vmem:[#allocation4 + $0x1b8] sm:$0xff]
    %v204 = vld [vmem:[#allocation4 + $0x1c0] sm:$0xff]
    %v205 = vld [vmem:[#allocation4 + $0x1c8] sm:$0xff]
    %v206 = vld [vmem:[#allocation4 + $0x1d0] sm:$0xff]
    %v207 = vld [vmem:[#allocation4 + $0x1d8] sm:$0xff]
    %v208 = vld [vmem:[#allocation4 + $0x1e0] sm:$0xff]
    %v209 = vld [vmem:[#allocation4 + $0x1e8] sm:$0xff]
    %v210 = vld [vmem:[#allocation4 + $0x1f0] sm:$0xff]
    %v211 = vld [vmem:[#allocation4 + $0x1f8] sm:$0xff]
    %v212 = vld [vmem:[#allocation4 + $0x200] sm:$0xff]
    %v213 = vld [vmem:[#allocation4 + $0x208] sm:$0xff]
    %v214 = vld [vmem:[#allocation4 + $0x210] sm:$0xff]
    %v215 = vld [vmem:[#allocation4 + $0x218] sm:$0xff]
    %v216 = vld [vmem:[#allocation4 + $0x220] sm:$0xff]
    %v217 = vld [vmem:[#allocation4 + $0x228] sm:$0xff]
    %v218 = vld [vmem:[#allocation4 + $0x230] sm:$0xff]
    %v219 = vld [vmem:[#allocation4 + $0x238] sm:$0xff]
    %v220 = vld [vmem:[#allocation4 + $0x240] sm:$0xff]
    %v221 = vld [vmem:[#allocation4 + $0x248] sm:$0xff]
    %v222 = vld [vmem:[#allocation4 + $0x250] sm:$0xff]
    %v223 = vld [vmem:[#allocation4 + $0x258] sm:$0xff]
    %v224 = vld [vmem:[#allocation4 + $0x260] sm:$0xff]
    %v225 = vld [vmem:[#allocation4 + $0x268] sm:$0xff]
    %v226 = vld [vmem:[#allocation4 + $0x270] sm:$0xff]
    %v227 = vld [vmem:[#allocation4 + $0x278] sm:$0xff]
    %v228 = vld [vmem:[#allocation4 + $0x280] sm:$0xff]
    %v229 = vld [vmem:[#allocation4 + $0x288] sm:$0xff]
    %v230 = vld [vmem:[#allocation4 + $0x290] sm:$0xff]
    %v231 = vld [vmem:[#allocation4 + $0x298] sm:$0xff]
    %v232 = vld [vmem:[#allocation4 + $0x2a0] sm:$0xff]
    %v233 = vld [vmem:[#allocation4 + $0x2a8] sm:$0xff]
    %v234 = vld [vmem:[#allocation4 + $0x2b0] sm:$0xff]
    %v235 = vld [vmem:[#allocation4 + $0x2b8] sm:$0xff]
    %v236 = vld [vmem:[#allocation4 + $0x2c0] sm:$0xff]
    %v237 = vld [vmem:[#allocation4 + $0x2c8] sm:$0xff]
    %v238 = vld [vmem:[#allocation4 + $0x2d0] sm:$0xff]
    %v239 = vld [vmem:[#allocation4 + $0x2d8] sm:$0xff]
    %v240 = vld [vmem:[#allocation4 + $0x2e0] sm:$0xff]
    %v241 = vld [vmem:[#allocation4 + $0x2e8] sm:$0xff]
    %v242 = vld [vmem:[#allocation4 + $0x2f0] sm:$0xff]
    %v243 = vld [vmem:[#allocation4 + $0x2f8] sm:$0xff]
    %v244 = vld [vmem:[%s4] sm:$0x3f]
    %v246 = vperm.slane %v244, 0
    %v247 = vperm.slane %v244, 1
    %v248 = vperm.slane %v244, 2
    %v249 = vperm.slane %v244, 3
    %v250 = vperm.slane %v244, 4
    %v251 = vperm.slane %v244, 5
    %v354 = vunpack.c.l.b16 %v148
    %v355 = vunpack.c.h.b16 %v148
    %v356 = vunpack.c.l.b16 %v149
    %v357 = vunpack.c.h.b16 %v149
    %v358 = vunpack.c.l.b16 %v150
    %v359 = vunpack.c.h.b16 %v150
    %v360 = vunpack.c.l.b16 %v151
    %v361 = vunpack.c.h.b16 %v151
    %v362 = vunpack.c.l.b16 %v152
    %v363 = vunpack.c.h.b16 %v152
    %v364 = vunpack.c.l.b16 %v153
    %v365 = vunpack.c.h.b16 %v153
    %v366 = vunpack.c.l.b16 %v154
    %v367 = vunpack.c.h.b16 %v154
    %v368 = vunpack.c.l.b16 %v155
    %v369 = vunpack.c.h.b16 %v155
    %v370 = vunpack.c.l.b16 %v156
    %v371 = vunpack.c.h.b16 %v156
    %v372 = vunpack.c.l.b16 %v157
    %v373 = vunpack.c.h.b16 %v157
    %v374 = vunpack.c.l.b16 %v158
    %v375 = vunpack.c.h.b16 %v158
    %v376 = vunpack.c.l.b16 %v159
    %v377 = vunpack.c.h.b16 %v159
    %v378 = vunpack.c.l.b16 %v160
    %v379 = vunpack.c.h.b16 %v160
    %v380 = vunpack.c.l.b16 %v161
    %v381 = vunpack.c.h.b16 %v161
    %v382 = vunpack.c.l.b16 %v162
    %v383 = vunpack.c.h.b16 %v162
    %v384 = vunpack.c.l.b16 %v163
    %v385 = vunpack.c.h.b16 %v163
    %v386 = vunpack.c.l.b16 %v164
    %v387 = vunpack.c.h.b16 %v164
    %v388 = vunpack.c.l.b16 %v165
    %v389 = vunpack.c.h.b16 %v165
    %v390 = vunpack.c.l.b16 %v166
    %v391 = vunpack.c.h.b16 %v166
    %v392 = vunpack.c.l.b16 %v167
    %v393 = vunpack.c.h.b16 %v167
    %v394 = vunpack.c.l.b16 %v168
    %v395 = vunpack.c.h.b16 %v168
    %v396 = vunpack.c.l.b16 %v169
    %v397 = vunpack.c.h.b16 %v169
    %v398 = vunpack.c.l.b16 %v170
    %v399 = vunpack.c.h.b16 %v170
    %v400 = vunpack.c.l.b16 %v171
    %v401 = vunpack.c.h.b16 %v171
    %v402 = vunpack.c.l.b16 %v172
    %v403 = vunpack.c.h.b16 %v172
    %v404 = vunpack.c.l.b16 %v173
    %v405 = vunpack.c.h.b16 %v173
    %v406 = vunpack.c.l.b16 %v174
    %v407 = vunpack.c.h.b16 %v174
    %v408 = vunpack.c.l.b16 %v175
    %v409 = vunpack.c.h.b16 %v175
    %v410 = vunpack.c.l.b16 %v176
    %v411 = vunpack.c.h.b16 %v176
    %v412 = vunpack.c.l.b16 %v177
    %v413 = vunpack.c.h.b16 %v177
    %v414 = vunpack.c.l.b16 %v178
    %v415 = vunpack.c.h.b16 %v178
    %v416 = vunpack.c.l.b16 %v179
    %v417 = vunpack.c.h.b16 %v179
    %v418 = vunpack.c.l.b16 %v180
    %v419 = vunpack.c.h.b16 %v180
    %v420 = vunpack.c.l.b16 %v181
    %v421 = vunpack.c.h.b16 %v181
    %v422 = vunpack.c.l.b16 %v182
    %v423 = vunpack.c.h.b16 %v182
    %v424 = vunpack.c.l.b16 %v183
    %v425 = vunpack.c.h.b16 %v183
    %v426 = vunpack.c.l.b16 %v184
    %v427 = vunpack.c.h.b16 %v184
    %v428 = vunpack.c.l.b16 %v185
    %v429 = vunpack.c.h.b16 %v185
    %v430 = vunpack.c.l.b16 %v186
    %v431 = vunpack.c.h.b16 %v186
    %v432 = vunpack.c.l.b16 %v187
    %v433 = vunpack.c.h.b16 %v187
    %v434 = vunpack.c.l.b16 %v188
    %v435 = vunpack.c.h.b16 %v188
    %v436 = vunpack.c.l.b16 %v189
    %v437 = vunpack.c.h.b16 %v189
    %v438 = vunpack.c.l.b16 %v190
    %v439 = vunpack.c.h.b16 %v190
    %v440 = vunpack.c.l.b16 %v191
    %v441 = vunpack.c.h.b16 %v191
    %v442 = vunpack.c.l.b16 %v192
    %v443 = vunpack.c.h.b16 %v192
    %v444 = vunpack.c.l.b16 %v193
    %v445 = vunpack.c.h.b16 %v193
    %v446 = vunpack.c.l.b16 %v194
    %v447 = vunpack.c.h.b16 %v194
    %v448 = vunpack.c.l.b16 %v195
    %v449 = vunpack.c.h.b16 %v195
    %v450 = vunpack.c.l.b16 %v196
    %v451 = vunpack.c.h.b16 %v196
    %v452 = vunpack.c.l.b16 %v197
    %v453 = vunpack.c.h.b16 %v197
    %v454 = vunpack.c.l.b16 %v198
    %v455 = vunpack.c.h.b16 %v198
    %v456 = vunpack.c.l.b16 %v199
    %v457 = vunpack.c.h.b16 %v199
    %v458 = vunpack.c.l.b16 %v200
    %v459 = vunpack.c.h.b16 %v200
    %v460 = vunpack.c.l.b16 %v201
    %v461 = vunpack.c.h.b16 %v201
    %v462 = vunpack.c.l.b16 %v202
    %v463 = vunpack.c.h.b16 %v202
    %v464 = vunpack.c.l.b16 %v203
    %v465 = vunpack.c.h.b16 %v203
    %v466 = vunpack.c.l.b16 %v204
    %v467 = vunpack.c.h.b16 %v204
    %v468 = vunpack.c.l.b16 %v205
    %v469 = vunpack.c.h.b16 %v205
    %v470 = vunpack.c.l.b16 %v206
    %v471 = vunpack.c.h.b16 %v206
    %v472 = vunpack.c.l.b16 %v207
    %v473 = vunpack.c.h.b16 %v207
    %v474 = vunpack.c.l.b16 %v208
    %v475 = vunpack.c.h.b16 %v208
    %v476 = vunpack.c.l.b16 %v209
    %v477 = vunpack.c.h.b16 %v209
    %v478 = vunpack.c.l.b16 %v210
    %v479 = vunpack.c.h.b16 %v210
    %v480 = vunpack.c.l.b16 %v211
    %v481 = vunpack.c.h.b16 %v211
    %v482 = vunpack.c.l.b16 %v212
    %v483 = vunpack.c.h.b16 %v212
    %v484 = vunpack.c.l.b16 %v213
    %v485 = vunpack.c.h.b16 %v213
    %v486 = vunpack.c.l.b16 %v214
    %v487 = vunpack.c.h.b16 %v214
    %v488 = vunpack.c.l.b16 %v215
    %v489 = vunpack.c.h.b16 %v215
    %v490 = vunpack.c.l.b16 %v216
    %v491 = vunpack.c.h.b16 %v216
    %v492 = vunpack.c.l.b16 %v217
    %v493 = vunpack.c.h.b16 %v217
    %v494 = vunpack.c.l.b16 %v218
    %v495 = vunpack.c.h.b16 %v218
    %v496 = vunpack.c.l.b16 %v219
    %v497 = vunpack.c.h.b16 %v219
    %v498 = vunpack.c.l.b16 %v220
    %v499 = vunpack.c.h.b16 %v220
    %v500 = vunpack.c.l.b16 %v221
    %v501 = vunpack.c.h.b16 %v221
    %v502 = vunpack.c.l.b16 %v222
    %v503 = vunpack.c.h.b16 %v222
    %v504 = vunpack.c.l.b16 %v223
    %v505 = vunpack.c.h.b16 %v223
    %v506 = vunpack.c.l.b16 %v224
    %v507 = vunpack.c.h.b16 %v224
    %v508 = vunpack.c.l.b16 %v225
    %v509 = vunpack.c.h.b16 %v225
    %v510 = vunpack.c.l.b16 %v226
    %v511 = vunpack.c.h.b16 %v226
    %v512 = vunpack.c.l.b16 %v227
    %v513 = vunpack.c.h.b16 %v227
    %v514 = vunpack.c.l.b16 %v228
    %v515 = vunpack.c.h.b16 %v228
    %v516 = vunpack.c.l.b16 %v229
    %v517 = vunpack.c.h.b16 %v229
    %v518 = vunpack.c.l.b16 %v230
    %v519 = vunpack.c.h.b16 %v230
    %v520 = vunpack.c.l.b16 %v231
    %v521 = vunpack.c.h.b16 %v231
    %v522 = vunpack.c.l.b16 %v232
    %v523 = vunpack.c.h.b16 %v232
    %v524 = vunpack.c.l.b16 %v233
    %v525 = vunpack.c.h.b16 %v233
    %v526 = vunpack.c.l.b16 %v234
    %v527 = vunpack.c.h.b16 %v234
    %v528 = vunpack.c.l.b16 %v235
    %v529 = vunpack.c.h.b16 %v235
    %v530 = vunpack.c.l.b16 %v236
    %v531 = vunpack.c.h.b16 %v236
    %v532 = vunpack.c.l.b16 %v237
    %v533 = vunpack.c.h.b16 %v237
    %v534 = vunpack.c.l.b16 %v238
    %v535 = vunpack.c.h.b16 %v238
    %v536 = vunpack.c.l.b16 %v239
    %v537 = vunpack.c.h.b16 %v239
    %v538 = vunpack.c.l.b16 %v240
    %v539 = vunpack.c.h.b16 %v240
    %v540 = vunpack.c.l.b16 %v241
    %v541 = vunpack.c.h.b16 %v241
    %v542 = vunpack.c.l.b16 %v242
    %v543 = vunpack.c.h.b16 %v242
    %v544 = vunpack.c.l.b16 %v243
    %v545 = vunpack.c.h.b16 %v243
    %v546 = vpack.c.b16 %v360, %v354
    %v547 = vpack.c.b16 %v361, %v355
    %v548 = vpack.c.b16 %v362, %v356
    %v549 = vpack.c.b16 %v363, %v357
    %v550 = vpack.c.b16 %v364, %v358
    %v551 = vpack.c.b16 %v365, %v359
    %v552 = vpack.c.b16 %v372, %v366
    %v553 = vpack.c.b16 %v373, %v367
    %v554 = vpack.c.b16 %v374, %v368
    %v555 = vpack.c.b16 %v375, %v369
    %v556 = vpack.c.b16 %v376, %v370
    %v557 = vpack.c.b16 %v377, %v371
    %v558 = vpack.c.b16 %v384, %v378
    %v559 = vpack.c.b16 %v385, %v379
    %v560 = vpack.c.b16 %v386, %v380
    %v561 = vpack.c.b16 %v387, %v381
    %v562 = vpack.c.b16 %v388, %v382
    %v563 = vpack.c.b16 %v389, %v383
    %v564 = vpack.c.b16 %v396, %v390
    %v565 = vpack.c.b16 %v397, %v391
    %v566 = vpack.c.b16 %v398, %v392
    %v567 = vpack.c.b16 %v399, %v393
    %v568 = vpack.c.b16 %v400, %v394
    %v569 = vpack.c.b16 %v401, %v395
    %v570 = vpack.c.b16 %v408, %v402
    %v571 = vpack.c.b16 %v409, %v403
    %v572 = vpack.c.b16 %v410, %v404
    %v573 = vpack.c.b16 %v411, %v405
    %v574 = vpack.c.b16 %v412, %v406
    %v575 = vpack.c.b16 %v413, %v407
    %v576 = vpack.c.b16 %v420, %v414
    %v577 = vpack.c.b16 %v421, %v415
    %v578 = vpack.c.b16 %v422, %v416
    %v579 = vpack.c.b16 %v423, %v417
    %v580 = vpack.c.b16 %v424, %v418
    %v581 = vpack.c.b16 %v425, %v419
    %v582 = vpack.c.b16 %v432, %v426
    %v583 = vpack.c.b16 %v433, %v427
    %v584 = vpack.c.b16 %v434, %v428
    %v585 = vpack.c.b16 %v435, %v429
    %v586 = vpack.c.b16 %v436, %v430
    %v587 = vpack.c.b16 %v437, %v431
    %v588 = vpack.c.b16 %v444, %v438
    %v589 = vpack.c.b16 %v445, %v439
    %v590 = vpack.c.b16 %v446, %v440
    %v591 = vpack.c.b16 %v447, %v441
    %v592 = vpack.c.b16 %v448, %v442
    %v593 = vpack.c.b16 %v449, %v443
    %v594 = vpack.c.b16 %v456, %v450
    %v595 = vpack.c.b16 %v457, %v451
    %v596 = vpack.c.b16 %v458, %v452
    %v597 = vpack.c.b16 %v459, %v453
    %v598 = vpack.c.b16 %v460, %v454
    %v599 = vpack.c.b16 %v461, %v455
    %v600 = vpack.c.b16 %v468, %v462
    %v601 = vpack.c.b16 %v469, %v463
    %v602 = vpack.c.b16 %v470, %v464
    %v603 = vpack.c.b16 %v471, %v465
    %v604 = vpack.c.b16 %v472, %v466
    %v605 = vpack.c.b16 %v473, %v467
    %v606 = vpack.c.b16 %v480, %v474
    %v607 = vpack.c.b16 %v481, %v475
    %v608 = vpack.c.b16 %v482, %v476
    %v609 = vpack.c.b16 %v483, %v477
    %v610 = vpack.c.b16 %v484, %v478
    %v611 = vpack.c.b16 %v485, %v479
    %v612 = vpack.c.b16 %v492, %v486
    %v613 = vpack.c.b16 %v493, %v487
    %v614 = vpack.c.b16 %v494, %v488
    %v615 = vpack.c.b16 %v495, %v489
    %v616 = vpack.c.b16 %v496, %v490
    %v617 = vpack.c.b16 %v497, %v491
    %v618 = vpack.c.b16 %v504, %v498
    %v619 = vpack.c.b16 %v505, %v499
    %v620 = vpack.c.b16 %v506, %v500
    %v621 = vpack.c.b16 %v507, %v501
    %v622 = vpack.c.b16 %v508, %v502
    %v623 = vpack.c.b16 %v509, %v503
    %v624 = vpack.c.b16 %v516, %v510
    %v625 = vpack.c.b16 %v517, %v511
    %v626 = vpack.c.b16 %v518, %v512
    %v627 = vpack.c.b16 %v519, %v513
    %v628 = vpack.c.b16 %v520, %v514
    %v629 = vpack.c.b16 %v521, %v515
    %v630 = vpack.c.b16 %v528, %v522
    %v631 = vpack.c.b16 %v529, %v523
    %v632 = vpack.c.b16 %v530, %v524
    %v633 = vpack.c.b16 %v531, %v525
    %v634 = vpack.c.b16 %v532, %v526
    %v635 = vpack.c.b16 %v533, %v527
    %v636 = vpack.c.b16 %v540, %v534
    %v637 = vpack.c.b16 %v541, %v535
    %v638 = vpack.c.b16 %v542, %v536
    %v639 = vpack.c.b16 %v543, %v537
    %v640 = vpack.c.b16 %v544, %v538
    %v641 = vpack.c.b16 %v545, %v539
    %738 = vmatpush.bf16.msra.mxu0 %v588
    %739 = vmatpush.bf16.msra.mxu0 %v582
    %740 = vmatpush.bf16.msra.mxu0 %v576
    %741 = vmatpush.bf16.msra.mxu0 %v570
    %742 = vmatpush.bf16.msra.mxu0 %v564
    %743 = vmatpush.bf16.msra.mxu0 %v558
    %744 = vmatpush.bf16.msra.mxu0 %v552
    %745 = vmatpush.bf16.msra.mxu0 %v546
    %746 = vmatmul.bf16.gmra.mxu0 %v146
    %v747 = vpop.f32.mrf.mxu0
    %v748 = vadd.f32 %v246, %v747
    %v749 = vpop.f32.mrf.mxu0
    %v750 = vadd.f32 %v246, %v749
    %751 = vdwg.mxu0
    %752 = vmatpush.bf16.msra.mxu0 %v636
    %753 = vmatpush.bf16.msra.mxu0 %v630
    %754 = vmatpush.bf16.msra.mxu0 %v624
    %755 = vmatpush.bf16.msra.mxu0 %v618
    %756 = vmatpush.bf16.msra.mxu0 %v612
    %757 = vmatpush.bf16.msra.mxu0 %v606
    %758 = vmatpush.bf16.msra.mxu0 %v600
    %759 = vmatpush.bf16.msra.mxu0 %v594
    %760 = vmatmul.bf16.gmra.mxu0 %v147
    %v761 = vpop.f32.mrf.mxu0
    %v762 = vadd.f32 %v748, %v761
    %v763 = vpop.f32.mrf.mxu0
    %v764 = vadd.f32 %v750, %v763
    %765 = vdwg.mxu0
    %766 = vmatpush.bf16.msra.mxu0 %v589
    %767 = vmatpush.bf16.msra.mxu0 %v583
    %768 = vmatpush.bf16.msra.mxu0 %v577
    %769 = vmatpush.bf16.msra.mxu0 %v571
    %770 = vmatpush.bf16.msra.mxu0 %v565
    %771 = vmatpush.bf16.msra.mxu0 %v559
    %772 = vmatpush.bf16.msra.mxu0 %v553
    %773 = vmatpush.bf16.msra.mxu0 %v547
    %774 = vmatmul.bf16.gmra.mxu0 %v146
    %v775 = vpop.f32.mrf.mxu0
    %v776 = vadd.f32 %v247, %v775
    %v777 = vpop.f32.mrf.mxu0
    %v778 = vadd.f32 %v247, %v777
    %779 = vdwg.mxu0
    %780 = vmatpush.bf16.msra.mxu0 %v637
    %781 = vmatpush.bf16.msra.mxu0 %v631
    %782 = vmatpush.bf16.msra.mxu0 %v625
    %783 = vmatpush.bf16.msra.mxu0 %v619
    %784 = vmatpush.bf16.msra.mxu0 %v613
    %785 = vmatpush.bf16.msra.mxu0 %v607
    %786 = vmatpush.bf16.msra.mxu0 %v601
    %787 = vmatpush.bf16.msra.mxu0 %v595
    %788 = vmatmul.bf16.gmra.mxu0 %v147
    %v789 = vpop.f32.mrf.mxu0
    %v790 = vadd.f32 %v776, %v789
    %v791 = vpop.f32.mrf.mxu0
    %v792 = vadd.f32 %v778, %v791
    %793 = vdwg.mxu0
    %794 = vmatpush.bf16.msra.mxu0 %v590
    %795 = vmatpush.bf16.msra.mxu0 %v584
    %796 = vmatpush.bf16.msra.mxu0 %v578
    %797 = vmatpush.bf16.msra.mxu0 %v572
    %798 = vmatpush.bf16.msra.mxu0 %v566
    %799 = vmatpush.bf16.msra.mxu0 %v560
    %800 = vmatpush.bf16.msra.mxu0 %v554
    %801 = vmatpush.bf16.msra.mxu0 %v548
    %802 = vmatmul.bf16.gmra.mxu0 %v146
    %v803 = vpop.f32.mrf.mxu0
    %v804 = vadd.f32 %v248, %v803
    %v805 = vpop.f32.mrf.mxu0
    %v806 = vadd.f32 %v248, %v805
    %807 = vdwg.mxu0
    %808 = vmatpush.bf16.msra.mxu0 %v638
    %809 = vmatpush.bf16.msra.mxu0 %v632
    %810 = vmatpush.bf16.msra.mxu0 %v626
    %811 = vmatpush.bf16.msra.mxu0 %v620
    %812 = vmatpush.bf16.msra.mxu0 %v614
    %813 = vmatpush.bf16.msra.mxu0 %v608
    %814 = vmatpush.bf16.msra.mxu0 %v602
    %815 = vmatpush.bf16.msra.mxu0 %v596
    %816 = vmatmul.bf16.gmra.mxu0 %v147
    %v817 = vpop.f32.mrf.mxu0
    %v818 = vadd.f32 %v804, %v817
    %v819 = vpop.f32.mrf.mxu0
    %v820 = vadd.f32 %v806, %v819
    %821 = vdwg.mxu0
    %822 = vmatpush.bf16.msra.mxu0 %v591
    %823 = vmatpush.bf16.msra.mxu0 %v585
    %824 = vmatpush.bf16.msra.mxu0 %v579
    %825 = vmatpush.bf16.msra.mxu0 %v573
    %826 = vmatpush.bf16.msra.mxu0 %v567
    %827 = vmatpush.bf16.msra.mxu0 %v561
    %828 = vmatpush.bf16.msra.mxu0 %v555
    %829 = vmatpush.bf16.msra.mxu0 %v549
    %830 = vmatmul.bf16.gmra.mxu0 %v146
    %v831 = vpop.f32.mrf.mxu0
    %v832 = vadd.f32 %v249, %v831
    %v833 = vpop.f32.mrf.mxu0
    %v834 = vadd.f32 %v249, %v833
    %835 = vdwg.mxu0
    %836 = vmatpush.bf16.msra.mxu0 %v639
    %837 = vmatpush.bf16.msra.mxu0 %v633
    %838 = vmatpush.bf16.msra.mxu0 %v627
    %839 = vmatpush.bf16.msra.mxu0 %v621
    %840 = vmatpush.bf16.msra.mxu0 %v615
    %841 = vmatpush.bf16.msra.mxu0 %v609
    %842 = vmatpush.bf16.msra.mxu0 %v603
    %843 = vmatpush.bf16.msra.mxu0 %v597
    %844 = vmatmul.bf16.gmra.mxu0 %v147
    %v845 = vpop.f32.mrf.mxu0
    %v846 = vadd.f32 %v832, %v845
    %v847 = vpop.f32.mrf.mxu0
    %v848 = vadd.f32 %v834, %v847
    %849 = vdwg.mxu0
    %850 = vmatpush.bf16.msra.mxu0 %v592
    %851 = vmatpush.bf16.msra.mxu0 %v586
    %852 = vmatpush.bf16.msra.mxu0 %v580
    %853 = vmatpush.bf16.msra.mxu0 %v574
    %854 = vmatpush.bf16.msra.mxu0 %v568
    %855 = vmatpush.bf16.msra.mxu0 %v562
    %856 = vmatpush.bf16.msra.mxu0 %v556
    %857 = vmatpush.bf16.msra.mxu0 %v550
    %858 = vmatmul.bf16.gmra.mxu0 %v146
    %v859 = vpop.f32.mrf.mxu0
    %v860 = vadd.f32 %v250, %v859
    %v861 = vpop.f32.mrf.mxu0
    %v862 = vadd.f32 %v250, %v861
    %863 = vdwg.mxu0
    %864 = vmatpush.bf16.msra.mxu0 %v640
    %865 = vmatpush.bf16.msra.mxu0 %v634
    %866 = vmatpush.bf16.msra.mxu0 %v628
    %867 = vmatpush.bf16.msra.mxu0 %v622
    %868 = vmatpush.bf16.msra.mxu0 %v616
    %869 = vmatpush.bf16.msra.mxu0 %v610
    %870 = vmatpush.bf16.msra.mxu0 %v604
    %871 = vmatpush.bf16.msra.mxu0 %v598
    %872 = vmatmul.bf16.gmra.mxu0 %v147
    %v873 = vpop.f32.mrf.mxu0
    %v874 = vadd.f32 %v860, %v873
    %v875 = vpop.f32.mrf.mxu0
    %v876 = vadd.f32 %v862, %v875
    %877 = vdwg.mxu0
    %878 = vmatpush.bf16.msra.mxu0 %v593
    %879 = vmatpush.bf16.msra.mxu0 %v587
    %880 = vmatpush.bf16.msra.mxu0 %v581
    %881 = vmatpush.bf16.msra.mxu0 %v575
    %882 = vmatpush.bf16.msra.mxu0 %v569
    %883 = vmatpush.bf16.msra.mxu0 %v563
    %884 = vmatpush.bf16.msra.mxu0 %v557
    %885 = vmatpush.bf16.msra.mxu0 %v551
    %886 = vmatmul.bf16.gmra.mxu0 %v146
    %v887 = vpop.f32.mrf.mxu0
    %v888 = vadd.f32 %v251, %v887
    %v889 = vpop.f32.mrf.mxu0
    %v890 = vadd.f32 %v251, %v889
    %891 = vdwg.mxu0
    %892 = vmatpush.bf16.msra.mxu0 %v641
    %893 = vmatpush.bf16.msra.mxu0 %v635
    %894 = vmatpush.bf16.msra.mxu0 %v629
    %895 = vmatpush.bf16.msra.mxu0 %v623
    %896 = vmatpush.bf16.msra.mxu0 %v617
    %897 = vmatpush.bf16.msra.mxu0 %v611
    %898 = vmatpush.bf16.msra.mxu0 %v605
    %899 = vmatpush.bf16.msra.mxu0 %v599
    %900 = vmatmul.bf16.gmra.mxu0 %v147
    %v901 = vpop.f32.mrf.mxu0
    %v902 = vadd.f32 %v888, %v901
    %v903 = vpop.f32.mrf.mxu0
    %v904 = vadd.f32 %v890, %v903
    %905 = vdwg.mxu0
    %v906 = vpack.c.bf16 %v790, %v762
    %v907 = vpack.c.bf16 %v846, %v818
    %v908 = vpack.c.bf16 %v902, %v874
    %v909 = vpack.c.bf16 %v792, %v764
    %v910 = vpack.c.bf16 %v848, %v820
    %v911 = vpack.c.bf16 %v904, %v876
    %912 = vst [vmem:[%s5] sm:$0xff] %v906
    %913 = vst [vmem:[%s5 + $0x8] sm:$0xff] %v907
    %914 = vst [vmem:[%s5 + $0x10] sm:$0xff] %v908
    %915 = vst [vmem:[%s5 + $0x18] sm:$0xff] %v909
    %916 = vst [vmem:[%s5 + $0x20] sm:$0xff] %v910
    %917 = vst [vmem:[%s5 + $0x28] sm:$0xff] %v911
    // Predicated region
    $region30: #{encoder_layer_forward.3} parent=1 // pred_check
      _
    $region31: #{encoder_layer_forward.3} parent=1 // pred_check_branch
      %919 = sbr.rel (0) target = $region33
    $region32: #{encoder_layer_forward.3} parent=1 // pred_region
      _
    $region33: #{encoder_layer_forward.3} parent=1 // pred_fallthru
      _
    // Predicated region
    $region34: #{encoder_layer_forward.3} parent=1 // pred_check
      _
    $region35: #{encoder_layer_forward.3} parent=1 // pred_check_branch
      %921 = sbr.rel (0) target = $region37
    $region36: #{encoder_layer_forward.3} parent=1 // pred_region
      _
    $region37: #{encoder_layer_forward.3} parent=1 // pred_fallthru
      _
    %922 = vsyncpa [#allocation3], 1
    %923 = vsyncpa [#allocation5], 1

// kernel: encoder_layer_forward.5
$region0: #{encoder_layer_forward.5}
  #allocation0 [shape = 'u32[]', space=smem, size = 0x4, offset = 0x4, fixed_abs, tag = 'smem constant byte address 0x4 - core index']
  #allocation1 [shape = 'u32[72,128]{1,0:T(1,128)}', space=vmem, size = 0x9000, scoped, tag = 'internal scratch']
  %s0 = inlined_call_operand.vmem [shape: bf16[16,256], index: 0, kind: input, shape index: {}]
  %s1 = inlined_call_operand.vmem [shape: f32[1,256], index: 1, kind: input, shape index: {}]
  %s2 = inlined_call_operand.vmem [shape: f32[1,256], index: 2, kind: input, shape index: {}]
  %s3 = inlined_call_operand.hbm [shape: bf16[256,512], index: 3, kind: input, shape index: {}]
  %s4 = inlined_call_operand.vmem [shape: f32[1,512], index: 4, kind: input, shape index: {}]
  %s5 = inlined_call_operand.hbm [shape: bf16[512,256], index: 5, kind: input, shape index: {}]
  %s6 = inlined_call_operand.vmem [shape: f32[1,256], index: 6, kind: input, shape index: {}]
  %s7 = inlined_call_operand.hbm [shape: f32[16,256], index: 7, kind: output, shape index: {}]
  %s8 = sld [smem:[#allocation0]]
  $region46: #{encoder_layer_forward.5} parent=0
    _
  %s10 = ssub.s32 1, %s8
  %s11 = scalar_select 0, %s10, %s8
  $region1: #{encoder_layer_forward.5} parent=0
    #allocation2 [shape = 'u8[262144]{0}', space=vmem, size = 0x40000, scoped, tag = 'input window, operand 3, single buffered']
    #allocation3 [shape = 's32[1]{0}', space=sflag, size = 0x4, scoped, tag = 'scoped memory for encoder_layer_forward.5']
    #allocation4 [shape = 's32[1]{0}', space=sflag, size = 0x4, scoped, tag = 'scoped memory for encoder_layer_forward.5']
    #allocation5 [shape = 'u8[262144]{0}', space=vmem, size = 0x40000, scoped, tag = 'input window, operand 5, single buffered']
    #allocation6 [shape = 's32[1]{0}', space=sflag, size = 0x4, scoped, tag = 'scoped memory for encoder_layer_forward.5']
    #allocation7 [shape = 'u8[16384]{0}', space=vmem, size = 0x4000, scoped, tag = 'output window, operand 0, single buffered']
    %12 = vsyncpa [#allocation3], 0
    %13 = vsyncpa [#allocation6], 0
    %14 = vsyncpa [#allocation4], 0
    // Predicated region
    $region2: #{encoder_layer_forward.5} parent=1 // pred_check
      _
    $region3: #{encoder_layer_forward.5} parent=1 // pred_check_branch
      %16 = sbr.rel (0) target = $region5
    $region4: #{encoder_layer_forward.5} parent=1 // pred_region
      _
    $region5: #{encoder_layer_forward.5} parent=1 // pred_fallthru
      _
    // Predicated region
    $region6: #{encoder_layer_forward.5} parent=1 // pred_check
      _
    $region7: #{encoder_layer_forward.5} parent=1 // pred_check_branch
      %18 = sbr.rel (0) target = $region9
    $region8: #{encoder_layer_forward.5} parent=1 // pred_region
      _
    $region9: #{encoder_layer_forward.5} parent=1 // pred_fallthru
      _
    // Predicated region
    $region10: #{encoder_layer_forward.5} parent=1 // pred_check
      _
    $region11: #{encoder_layer_forward.5} parent=1 // pred_check_branch
      %20 = sbr.rel (0) target = $region13
    $region12: #{encoder_layer_forward.5} parent=1 // pred_region
      _
    $region13: #{encoder_layer_forward.5} parent=1 // pred_fallthru
      _
    // Predicated region
    $region14: #{encoder_layer_forward.5} parent=1 // pred_check
      _
    $region15: #{encoder_layer_forward.5} parent=1 // pred_check_branch
      %22 = sbr.rel (0) target = $region17
    $region16: #{encoder_layer_forward.5} parent=1 // pred_region
      %24 = vsyncadd [#allocation3], 0
      %s25 = sshll.u32 %s3, 4
      %s26 = int_to_ptr.hbm [resolvable:$true] %s25
      %s27 = sshll.u32 [#allocation2], 4
      %s28 = int_to_ptr.vmem [resolvable:$true] %s27
      %33 = dma.hbm_to_vmem [thread:$0]  %s26, 8192, %s28, [#allocation3], 256, 256, 16
    $region17: #{encoder_layer_forward.5} parent=1 // pred_fallthru
      _
    // Predicated region
    $region18: #{encoder_layer_forward.5} parent=1 // pred_check
      _
    $region19: #{encoder_layer_forward.5} parent=1 // pred_check_branch
      %35 = sbr.rel (0) target = $region21
    $region20: #{encoder_layer_forward.5} parent=1 // pred_region
      _
    $region21: #{encoder_layer_forward.5} parent=1 // pred_fallthru
      _
    // Predicated region
    $region22: #{encoder_layer_forward.5} parent=1 // pred_check
      _
    $region23: #{encoder_layer_forward.5} parent=1 // pred_check_branch
      %37 = sbr.rel (0) target = $region25
    $region24: #{encoder_layer_forward.5} parent=1 // pred_region
      %39 = vsyncadd [#allocation6], 0
      %s40 = sshll.u32 %s5, 4
      %s41 = int_to_ptr.hbm [resolvable:$true] %s40
      %s42 = sshll.u32 [#allocation5], 4
      %s43 = int_to_ptr.vmem [resolvable:$true] %s42
      %48 = dma.hbm_to_vmem [thread:$0]  %s41, 8192, %s43, [#allocation6], 128, 128, 8
    $region25: #{encoder_layer_forward.5} parent=1 // pred_fallthru
      _
    // Predicated region
    $region26: #{encoder_layer_forward.5} parent=1 // pred_check
      _
    $region27: #{encoder_layer_forward.5} parent=1 // pred_check_branch
      %50 = sbr.rel (0) target = $region29
    $region28: #{encoder_layer_forward.5} parent=1 // pred_region
      _
    $region29: #{encoder_layer_forward.5} parent=1 // pred_fallthru
      _
    // Predicated region
    $region30: #{encoder_layer_forward.5} parent=1 // pred_check
      _
    $region31: #{encoder_layer_forward.5} parent=1 // pred_check_branch
      %52 = sbr.rel (0) target = $region33
    $region32: #{encoder_layer_forward.5} parent=1 // pred_region
      %54 = dma.done [#allocation3], 8192
    $region33: #{encoder_layer_forward.5} parent=1 // pred_fallthru
      _
    // Predicated region
    $region34: #{encoder_layer_forward.5} parent=1 // pred_check
      _
    $region35: #{encoder_layer_forward.5} parent=1 // pred_check_branch
      %56 = sbr.rel (0) target = $region37
    $region36: #{encoder_layer_forward.5} parent=1 // pred_region
      %58 = dma.done [#allocation6], 8192
    $region37: #{encoder_layer_forward.5} parent=1 // pred_fallthru
      _
    %v59 = vld [vmem:[%s0] sm:$0xff]
    %v60 = vld [vmem:[%s0 + $0x8] sm:$0xff]
    %v61 = vunpack.c.l.bf16 %v59
    %v62 = vunpack.c.h.bf16 %v59
    %v63 = vunpack.c.l.bf16 %v60
    %v64 = vunpack.c.h.bf16 %v60
    %v65 = vld [vmem:[%s1] sm:$0x3]
    %v66 = vld [vmem:[%s2] sm:$0x3]
    %v67 = vadd.f32 %v61, %v62
    %68 = vadd.xlane.f32.xlu0 %v67
    %v69 = vpop.xlane.xlu0 %68
    %v70 = vadd.f32 %v63, %v64
    %71 = vadd.xlane.f32.xlu0 %v70
    %v72 = vpop.xlane.xlu0 %71
    %v73 = vrcp.pop 256.0
    %v74 = vmul.f32 256.0, %v73
    %v75 = vsub.f32 1.0, %v74
    %v76 = vmul.f32 %v73, %v75
    %v77 = vadd.f32 %v73, %v76
    %vm78 = vweird.f32 %v73
    %v79 = vsel %vm78, %v73, %v77
    %v80 = vmul.f32 %v69, %v79
    %v81 = vmul.f32 %v72, %v79
    %v82 = vsub.f32 %v61, %v80
    %v83 = vsub.f32 %v62, %v80
    %v84 = vsub.f32 %v63, %v81
    %v85 = vsub.f32 %v64, %v81
    %v86 = vmul.f32 %v82, %v82
    %v87 = vmul.f32 %v83, %v83
    %v88 = vmul.f32 %v84, %v84
    %v89 = vmul.f32 %v85, %v85
    %v90 = vadd.f32 %v86, %v87
    %91 = vadd.xlane.f32.xlu0 %v90
    %v92 = vpop.xlane.xlu0 %91
    %v93 = vadd.f32 %v88, %v89
    %94 = vadd.xlane.f32.xlu0 %v93
    %v95 = vpop.xlane.xlu0 %94
    %v96 = vrcp.pop 255.0
    %v97 = vmul.f32 255.0, %v96
    %v98 = vsub.f32 1.0, %v97
    %v99 = vmul.f32 %v96, %v98
    %v100 = vadd.f32 %v96, %v99
    %vm101 = vweird.f32 %v96
    %v102 = vsel %vm101, %v96, %v100
    %v103 = vmul.f32 %v92, %v102
    %v104 = vmul.f32 %v95, %v102
    %v105 = vrsqrt.pop %v103
    %v106 = vmul.f32 %v105, %v103
    %v107 = vmul.f32 %v106, %v105
    %v108 = vmul.f32 0.5, %v107
    %v109 = vsub.f32 1.5, %v108
    %v110 = vmul.f32 %v105, %v109
    %v111 = vmul.f32 %v103, %v110
    %vm112 = vcmp.eq.f32.partialorder %v103, inf
    %v113 = vsel %vm112, %v103, %v111
    %vm114 = vcmp.eq.f32.partialorder %v103, 0.0
    %v115 = vand.u32 %v103, 2147483648
    %v116 = vsel %vm114, %v115, %v113
    %v117 = vrsqrt.pop %v104
    %v118 = vmul.f32 %v117, %v104
    %v119 = vmul.f32 %v118, %v117
    %v120 = vmul.f32 0.5, %v119
    %v121 = vsub.f32 1.5, %v120
    %v122 = vmul.f32 %v117, %v121
    %v123 = vmul.f32 %v104, %v122
    %vm124 = vcmp.eq.f32.partialorder %v104, inf
    %v125 = vsel %vm124, %v104, %v123
    %vm126 = vcmp.eq.f32.partialorder %v104, 0.0
    %v127 = vand.u32 %v104, 2147483648
    %v128 = vsel %vm126, %v127, %v125
    %v129 = vadd.f32 %v116, 1e-06
    %v130 = vadd.f32 %v128, 1e-06
    %v131 = vrcp.pop %v129
    %v132 = vrcp.pop %v130
    %v133 = vmul.f32 %v82, %v131
    %v134 = vmul.f32 %v83, %v131
    %v135 = vmul.f32 %v84, %v132
    %v136 = vmul.f32 %v85, %v132
    %v138 = vperm.slane %v65, 0
    %v139 = vperm.slane %v65, 1
    %v142 = vmul.f32 %v133, %v138
    %v143 = vmul.f32 %v134, %v139
    %v144 = vmul.f32 %v135, %v138
    %v145 = vmul.f32 %v136, %v139
    %v147 = vperm.slane %v66, 0
    %v148 = vperm.slane %v66, 1
    %v151 = vadd.f32 %v142, %v147
    %v152 = vadd.f32 %v143, %v148
    %v153 = vadd.f32 %v144, %v147
    %v154 = vadd.f32 %v145, %v148
    %v155 = vpack.c.bf16 %v153, %v151
    %v156 = vpack.c.bf16 %v154, %v152
    %v157 = vld [vmem:[#allocation2] sm:$0xff]
    %v158 = vld [vmem:[#allocation2 + $0x8] sm:$0xff]
    %v159 = vld [vmem:[#allocation2 + $0x10] sm:$0xff]
    %v160 = vld [vmem:[#allocation2 + $0x18] sm:$0xff]
    %v161 = vld [vmem:[#allocation2 + $0x20] sm:$0xff]
    %v162 = vld [vmem:[#allocation2 + $0x28] sm:$0xff]
    %v163 = vld [vmem:[#allocation2 + $0x30] sm:$0xff]
    %v164 = vld [vmem:[#allocation2 + $0x38] sm:$0xff]
    %v165 = vld [vmem:[#allocation2 + $0x40] sm:$0xff]
    %v166 = vld [vmem:[#allocation2 + $0x48] sm:$0xff]
    %v167 = vld [vmem:[#allocation2 + $0x50] sm:$0xff]
    %v168 = vld [vmem:[#allocation2 + $0x58] sm:$0xff]
    %v169 = vld [vmem:[#allocation2 + $0x60] sm:$0xff]
    %v170 = vld [vmem:[#allocation2 + $0x68] sm:$0xff]
    %v171 = vld [vmem:[#allocation2 + $0x70] sm:$0xff]
    %v172 = vld [vmem:[#allocation2 + $0x78] sm:$0xff]
    %v173 = vld [vmem:[#allocation2 + $0x80] sm:$0xff]
    %v174 = vld [vmem:[#allocation2 + $0x88] sm:$0xff]
    %v175 = vld [vmem:[#allocation2 + $0x90] sm:$0xff]
    %v176 = vld [vmem:[#allocation2 + $0x98] sm:$0xff]
    %v177 = vld [vmem:[#allocation2 + $0xa0] sm:$0xff]
    %v178 = vld [vmem:[#allocation2 + $0xa8] sm:$0xff]
    %v179 = vld [vmem:[#allocation2 + $0xb0] sm:$0xff]
    %v180 = vld [vmem:[#allocation2 + $0xb8] sm:$0xff]
    %v181 = vld [vmem:[#allocation2 + $0xc0] sm:$0xff]
    %v182 = vld [vmem:[#allocation2 + $0xc8] sm:$0xff]
    %v183 = vld [vmem:[#allocation2 + $0xd0] sm:$0xff]
    %v184 = vld [vmem:[#allocation2 + $0xd8] sm:$0xff]
    %v185 = vld [vmem:[#allocation2 + $0xe0] sm:$0xff]
    %v186 = vld [vmem:[#allocation2 + $0xe8] sm:$0xff]
    %v187 = vld [vmem:[#allocation2 + $0xf0] sm:$0xff]
    %v188 = vld [vmem:[#allocation2 + $0xf8] sm:$0xff]
    %v189 = vld [vmem:[#allocation2 + $0x100] sm:$0xff]
    %v190 = vld [vmem:[#allocation2 + $0x108] sm:$0xff]
    %v191 = vld [vmem:[#allocation2 + $0x110] sm:$0xff]
    %v192 = vld [vmem:[#allocation2 + $0x118] sm:$0xff]
    %v193 = vld [vmem:[#allocation2 + $0x120] sm:$0xff]
    %v194 = vld [vmem:[#allocation2 + $0x128] sm:$0xff]
    %v195 = vld [vmem:[#allocation2 + $0x130] sm:$0xff]
    %v196 = vld [vmem:[#allocation2 + $0x138] sm:$0xff]
    %v197 = vld [vmem:[#allocation2 + $0x140] sm:$0xff]
    %v198 = vld [vmem:[#allocation2 + $0x148] sm:$0xff]
    %v199 = vld [vmem:[#allocation2 + $0x150] sm:$0xff]
    %v200 = vld [vmem:[#allocation2 + $0x158] sm:$0xff]
    %v201 = vld [vmem:[#allocation2 + $0x160] sm:$0xff]
    %v202 = vld [vmem:[#allocation2 + $0x168] sm:$0xff]
    %v203 = vld [vmem:[#allocation2 + $0x170] sm:$0xff]
    %v204 = vld [vmem:[#allocation2 + $0x178] sm:$0xff]
    %v205 = vld [vmem:[#allocation2 + $0x180] sm:$0xff]
    %v206 = vld [vmem:[#allocation2 + $0x188] sm:$0xff]
    %v207 = vld [vmem:[#allocation2 + $0x190] sm:$0xff]
    %v208 = vld [vmem:[#allocation2 + $0x198] sm:$0xff]
    %v209 = vld [vmem:[#allocation2 + $0x1a0] sm:$0xff]
    %v210 = vld [vmem:[#allocation2 + $0x1a8] sm:$0xff]
    %v211 = vld [vmem:[#allocation2 + $0x1b0] sm:$0xff]
    %v212 = vld [vmem:[#allocation2 + $0x1b8] sm:$0xff]
    %v213 = vld [vmem:[#allocation2 + $0x1c0] sm:$0xff]
    %v214 = vld [vmem:[#allocation2 + $0x1c8] sm:$0xff]
    %v215 = vld [vmem:[#allocation2 + $0x1d0] sm:$0xff]
    %v216 = vld [vmem:[#allocation2 + $0x1d8] sm:$0xff]
    %v217 = vld [vmem:[#allocation2 + $0x1e0] sm:$0xff]
    %v218 = vld [vmem:[#allocation2 + $0x1e8] sm:$0xff]
    %v219 = vld [vmem:[#allocation2 + $0x1f0] sm:$0xff]
    %v220 = vld [vmem:[#allocation2 + $0x1f8] sm:$0xff]
    %v221 = vld [vmem:[%s4] sm:$0xf]
    %v223 = vperm.slane %v221, 0
    %v224 = vperm.slane %v221, 1
    %v225 = vperm.slane %v221, 2
    %v226 = vperm.slane %v221, 3
    %v295 = vunpack.c.l.b16 %v157
    %v296 = vunpack.c.h.b16 %v157
    %v297 = vunpack.c.l.b16 %v158
    %v298 = vunpack.c.h.b16 %v158
    %v299 = vunpack.c.l.b16 %v159
    %v300 = vunpack.c.h.b16 %v159
    %v301 = vunpack.c.l.b16 %v160
    %v302 = vunpack.c.h.b16 %v160
    %v303 = vunpack.c.l.b16 %v161
    %v304 = vunpack.c.h.b16 %v161
    %v305 = vunpack.c.l.b16 %v162
    %v306 = vunpack.c.h.b16 %v162
    %v307 = vunpack.c.l.b16 %v163
    %v308 = vunpack.c.h.b16 %v163
    %v309 = vunpack.c.l.b16 %v164
    %v310 = vunpack.c.h.b16 %v164
    %v311 = vunpack.c.l.b16 %v165
    %v312 = vunpack.c.h.b16 %v165
    %v313 = vunpack.c.l.b16 %v166
    %v314 = vunpack.c.h.b16 %v166
    %v315 = vunpack.c.l.b16 %v167
    %v316 = vunpack.c.h.b16 %v167
    %v317 = vunpack.c.l.b16 %v168
    %v318 = vunpack.c.h.b16 %v168
    %v319 = vunpack.c.l.b16 %v169
    %v320 = vunpack.c.h.b16 %v169
    %v321 = vunpack.c.l.b16 %v170
    %v322 = vunpack.c.h.b16 %v170
    %v323 = vunpack.c.l.b16 %v171
    %v324 = vunpack.c.h.b16 %v171
    %v325 = vunpack.c.l.b16 %v172
    %v326 = vunpack.c.h.b16 %v172
    %v327 = vunpack.c.l.b16 %v173
    %v328 = vunpack.c.h.b16 %v173
    %v329 = vunpack.c.l.b16 %v174
    %v330 = vunpack.c.h.b16 %v174
    %v331 = vunpack.c.l.b16 %v175
    %v332 = vunpack.c.h.b16 %v175
    %v333 = vunpack.c.l.b16 %v176
    %v334 = vunpack.c.h.b16 %v176
    %v335 = vunpack.c.l.b16 %v177
    %v336 = vunpack.c.h.b16 %v177
    %v337 = vunpack.c.l.b16 %v178
    %v338 = vunpack.c.h.b16 %v178
    %v339 = vunpack.c.l.b16 %v179
    %v340 = vunpack.c.h.b16 %v179
    %v341 = vunpack.c.l.b16 %v180
    %v342 = vunpack.c.h.b16 %v180
    %v343 = vunpack.c.l.b16 %v181
    %v344 = vunpack.c.h.b16 %v181
    %v345 = vunpack.c.l.b16 %v182
    %v346 = vunpack.c.h.b16 %v182
    %v347 = vunpack.c.l.b16 %v183
    %v348 = vunpack.c.h.b16 %v183
    %v349 = vunpack.c.l.b16 %v184
    %v350 = vunpack.c.h.b16 %v184
    %v351 = vunpack.c.l.b16 %v185
    %v352 = vunpack.c.h.b16 %v185
    %v353 = vunpack.c.l.b16 %v186
    %v354 = vunpack.c.h.b16 %v186
    %v355 = vunpack.c.l.b16 %v187
    %v356 = vunpack.c.h.b16 %v187
    %v357 = vunpack.c.l.b16 %v188
    %v358 = vunpack.c.h.b16 %v188
    %v359 = vunpack.c.l.b16 %v189
    %v360 = vunpack.c.h.b16 %v189
    %v361 = vunpack.c.l.b16 %v190
    %v362 = vunpack.c.h.b16 %v190
    %v363 = vunpack.c.l.b16 %v191
    %v364 = vunpack.c.h.b16 %v191
    %v365 = vunpack.c.l.b16 %v192
    %v366 = vunpack.c.h.b16 %v192
    %v367 = vunpack.c.l.b16 %v193
    %v368 = vunpack.c.h.b16 %v193
    %v369 = vunpack.c.l.b16 %v194
    %v370 = vunpack.c.h.b16 %v194
    %v371 = vunpack.c.l.b16 %v195
    %v372 = vunpack.c.h.b16 %v195
    %v373 = vunpack.c.l.b16 %v196
    %v374 = vunpack.c.h.b16 %v196
    %v375 = vunpack.c.l.b16 %v197
    %v376 = vunpack.c.h.b16 %v197
    %v377 = vunpack.c.l.b16 %v198
    %v378 = vunpack.c.h.b16 %v198
    %v379 = vunpack.c.l.b16 %v199
    %v380 = vunpack.c.h.b16 %v199
    %v381 = vunpack.c.l.b16 %v200
    %v382 = vunpack.c.h.b16 %v200
    %v383 = vunpack.c.l.b16 %v201
    %v384 = vunpack.c.h.b16 %v201
    %v385 = vunpack.c.l.b16 %v202
    %v386 = vunpack.c.h.b16 %v202
    %v387 = vunpack.c.l.b16 %v203
    %v388 = vunpack.c.h.b16 %v203
    %v389 = vunpack.c.l.b16 %v204
    %v390 = vunpack.c.h.b16 %v204
    %v391 = vunpack.c.l.b16 %v205
    %v392 = vunpack.c.h.b16 %v205
    %v393 = vunpack.c.l.b16 %v206
    %v394 = vunpack.c.h.b16 %v206
    %v395 = vunpack.c.l.b16 %v207
    %v396 = vunpack.c.h.b16 %v207
    %v397 = vunpack.c.l.b16 %v208
    %v398 = vunpack.c.h.b16 %v208
    %v399 = vunpack.c.l.b16 %v209
    %v400 = vunpack.c.h.b16 %v209
    %v401 = vunpack.c.l.b16 %v210
    %v402 = vunpack.c.h.b16 %v210
    %v403 = vunpack.c.l.b16 %v211
    %v404 = vunpack.c.h.b16 %v211
    %v405 = vunpack.c.l.b16 %v212
    %v406 = vunpack.c.h.b16 %v212
    %v407 = vunpack.c.l.b16 %v213
    %v408 = vunpack.c.h.b16 %v213
    %v409 = vunpack.c.l.b16 %v214
    %v410 = vunpack.c.h.b16 %v214
    %v411 = vunpack.c.l.b16 %v215
    %v412 = vunpack.c.h.b16 %v215
    %v413 = vunpack.c.l.b16 %v216
    %v414 = vunpack.c.h.b16 %v216
    %v415 = vunpack.c.l.b16 %v217
    %v416 = vunpack.c.h.b16 %v217
    %v417 = vunpack.c.l.b16 %v218
    %v418 = vunpack.c.h.b16 %v218
    %v419 = vunpack.c.l.b16 %v219
    %v420 = vunpack.c.h.b16 %v219
    %v421 = vunpack.c.l.b16 %v220
    %v422 = vunpack.c.h.b16 %v220
    %v423 = vpack.c.b16 %v299, %v295
    %v424 = vpack.c.b16 %v300, %v296
    %v425 = vpack.c.b16 %v301, %v297
    %v426 = vpack.c.b16 %v302, %v298
    %v427 = vpack.c.b16 %v307, %v303
    %v428 = vpack.c.b16 %v308, %v304
    %v429 = vpack.c.b16 %v309, %v305
    %v430 = vpack.c.b16 %v310, %v306
    %v431 = vpack.c.b16 %v315, %v311
    %v432 = vpack.c.b16 %v316, %v312
    %v433 = vpack.c.b16 %v317, %v313
    %v434 = vpack.c.b16 %v318, %v314
    %v435 = vpack.c.b16 %v323, %v319
    %v436 = vpack.c.b16 %v324, %v320
    %v437 = vpack.c.b16 %v325, %v321
    %v438 = vpack.c.b16 %v326, %v322
    %v439 = vpack.c.b16 %v331, %v327
    %v440 = vpack.c.b16 %v332, %v328
    %v441 = vpack.c.b16 %v333, %v329
    %v442 = vpack.c.b16 %v334, %v330
    %v443 = vpack.c.b16 %v339, %v335
    %v444 = vpack.c.b16 %v340, %v336
    %v445 = vpack.c.b16 %v341, %v337
    %v446 = vpack.c.b16 %v342, %v338
    %v447 = vpack.c.b16 %v347, %v343
    %v448 = vpack.c.b16 %v348, %v344
    %v449 = vpack.c.b16 %v349, %v345
    %v450 = vpack.c.b16 %v350, %v346
    %v451 = vpack.c.b16 %v355, %v351
    %v452 = vpack.c.b16 %v356, %v352
    %v453 = vpack.c.b16 %v357, %v353
    %v454 = vpack.c.b16 %v358, %v354
    %v455 = vpack.c.b16 %v363, %v359
    %v456 = vpack.c.b16 %v364, %v360
    %v457 = vpack.c.b16 %v365, %v361
    %v458 = vpack.c.b16 %v366, %v362
    %v459 = vpack.c.b16 %v371, %v367
    %v460 = vpack.c.b16 %v372, %v368
    %v461 = vpack.c.b16 %v373, %v369
    %v462 = vpack.c.b16 %v374, %v370
    %v463 = vpack.c.b16 %v379, %v375
    %v464 = vpack.c.b16 %v380, %v376
    %v465 = vpack.c.b16 %v381, %v377
    %v466 = vpack.c.b16 %v382, %v378
    %v467 = vpack.c.b16 %v387, %v383
    %v468 = vpack.c.b16 %v388, %v384
    %v469 = vpack.c.b16 %v389, %v385
    %v470 = vpack.c.b16 %v390, %v386
    %v471 = vpack.c.b16 %v395, %v391
    %v472 = vpack.c.b16 %v396, %v392
    %v473 = vpack.c.b16 %v397, %v393
    %v474 = vpack.c.b16 %v398, %v394
    %v475 = vpack.c.b16 %v403, %v399
    %v476 = vpack.c.b16 %v404, %v400
    %v477 = vpack.c.b16 %v405, %v401
    %v478 = vpack.c.b16 %v406, %v402
    %v479 = vpack.c.b16 %v411, %v407
    %v480 = vpack.c.b16 %v412, %v408
    %v481 = vpack.c.b16 %v413, %v409
    %v482 = vpack.c.b16 %v414, %v410
    %v483 = vpack.c.b16 %v419, %v415
    %v484 = vpack.c.b16 %v420, %v416
    %v485 = vpack.c.b16 %v421, %v417
    %v486 = vpack.c.b16 %v422, %v418
    %551 = vmatpush.bf16.msra.mxu0 %v451
    %552 = vmatpush.bf16.msra.mxu0 %v447
    %553 = vmatpush.bf16.msra.mxu0 %v443
    %554 = vmatpush.bf16.msra.mxu0 %v439
    %555 = vmatpush.bf16.msra.mxu0 %v435
    %556 = vmatpush.bf16.msra.mxu0 %v431
    %557 = vmatpush.bf16.msra.mxu0 %v427
    %558 = vmatpush.bf16.msra.mxu0 %v423
    %559 = vmatmul.bf16.gmra.mxu0 %v155
    %v560 = vpop.f32.mrf.mxu0
    %v561 = vadd.f32 %v223, %v560
    %v562 = vpop.f32.mrf.mxu0
    %v563 = vadd.f32 %v223, %v562
    %564 = vdwg.mxu0
    %565 = vmatpush.bf16.msra.mxu0 %v483
    %566 = vmatpush.bf16.msra.mxu0 %v479
    %567 = vmatpush.bf16.msra.mxu0 %v475
    %568 = vmatpush.bf16.msra.mxu0 %v471
    %569 = vmatpush.bf16.msra.mxu0 %v467
    %570 = vmatpush.bf16.msra.mxu0 %v463
    %571 = vmatpush.bf16.msra.mxu0 %v459
    %572 = vmatpush.bf16.msra.mxu0 %v455
    %573 = vmatmul.bf16.gmra.mxu0 %v156
    %v574 = vpop.f32.mrf.mxu0
    %v575 = vadd.f32 %v561, %v574
    %v576 = vpop.f32.mrf.mxu0
    %v577 = vadd.f32 %v563, %v576
    %578 = vdwg.mxu0
    %579 = vmatpush.bf16.msra.mxu0 %v452
    %580 = vmatpush.bf16.msra.mxu0 %v448
    %581 = vmatpush.bf16.msra.mxu0 %v444
    %582 = vmatpush.bf16.msra.mxu0 %v440
    %583 = vmatpush.bf16.msra.mxu0 %v436
    %584 = vmatpush.bf16.msra.mxu0 %v432
    %585 = vmatpush.bf16.msra.mxu0 %v428
    %586 = vmatpush.bf16.msra.mxu0 %v424
    %587 = vmatmul.bf16.gmra.mxu0 %v155
    %v588 = vpop.f32.mrf.mxu0
    %v589 = vadd.f32 %v224, %v588
    %v590 = vpop.f32.mrf.mxu0
    %v591 = vadd.f32 %v224, %v590
    %592 = vdwg.mxu0
    %593 = vmatpush.bf16.msra.mxu0 %v484
    %594 = vmatpush.bf16.msra.mxu0 %v480
    %595 = vmatpush.bf16.msra.mxu0 %v476
    %596 = vmatpush.bf16.msra.mxu0 %v472
    %597 = vmatpush.bf16.msra.mxu0 %v468
    %598 = vmatpush.bf16.msra.mxu0 %v464
    %599 = vmatpush.bf16.msra.mxu0 %v460
    %600 = vmatpush.bf16.msra.mxu0 %v456
    %601 = vmatmul.bf16.gmra.mxu0 %v156
    %v602 = vpop.f32.mrf.mxu0
    %v603 = vadd.f32 %v589, %v602
    %v604 = vpop.f32.mrf.mxu0
    %v605 = vadd.f32 %v591, %v604
    %606 = vdwg.mxu0
    %607 = vmatpush.bf16.msra.mxu0 %v453
    %608 = vmatpush.bf16.msra.mxu0 %v449
    %609 = vmatpush.bf16.msra.mxu0 %v445
    %610 = vmatpush.bf16.msra.mxu0 %v441
    %611 = vmatpush.bf16.msra.mxu0 %v437
    %612 = vmatpush.bf16.msra.mxu0 %v433
    %613 = vmatpush.bf16.msra.mxu0 %v429
    %614 = vmatpush.bf16.msra.mxu0 %v425
    %615 = vmatmul.bf16.gmra.mxu0 %v155
    %v616 = vpop.f32.mrf.mxu0
    %v617 = vadd.f32 %v225, %v616
    %v618 = vpop.f32.mrf.mxu0
    %v619 = vadd.f32 %v225, %v618
    %620 = vdwg.mxu0
    %621 = vmatpush.bf16.msra.mxu0 %v485
    %622 = vmatpush.bf16.msra.mxu0 %v481
    %623 = vmatpush.bf16.msra.mxu0 %v477
    %624 = vmatpush.bf16.msra.mxu0 %v473
    %625 = vmatpush.bf16.msra.mxu0 %v469
    %626 = vmatpush.bf16.msra.mxu0 %v465
    %627 = vmatpush.bf16.msra.mxu0 %v461
    %628 = vmatpush.bf16.msra.mxu0 %v457
    %629 = vmatmul.bf16.gmra.mxu0 %v156
    %v630 = vpop.f32.mrf.mxu0
    %v631 = vadd.f32 %v617, %v630
    %v632 = vpop.f32.mrf.mxu0
    %v633 = vadd.f32 %v619, %v632
    %634 = vdwg.mxu0
    %635 = vmatpush.bf16.msra.mxu0 %v454
    %636 = vmatpush.bf16.msra.mxu0 %v450
    %637 = vmatpush.bf16.msra.mxu0 %v446
    %638 = vmatpush.bf16.msra.mxu0 %v442
    %639 = vmatpush.bf16.msra.mxu0 %v438
    %640 = vmatpush.bf16.msra.mxu0 %v434
    %641 = vmatpush.bf16.msra.mxu0 %v430
    %642 = vmatpush.bf16.msra.mxu0 %v426
    %643 = vmatmul.bf16.gmra.mxu0 %v155
    %v644 = vpop.f32.mrf.mxu0
    %v645 = vadd.f32 %v226, %v644
    %v646 = vpop.f32.mrf.mxu0
    %v647 = vadd.f32 %v226, %v646
    %648 = vdwg.mxu0
    %649 = vmatpush.bf16.msra.mxu0 %v486
    %650 = vmatpush.bf16.msra.mxu0 %v482
    %651 = vmatpush.bf16.msra.mxu0 %v478
    %652 = vmatpush.bf16.msra.mxu0 %v474
    %653 = vmatpush.bf16.msra.mxu0 %v470
    %654 = vmatpush.bf16.msra.mxu0 %v466
    %655 = vmatpush.bf16.msra.mxu0 %v462
    %656 = vmatpush.bf16.msra.mxu0 %v458
    %657 = vmatmul.bf16.gmra.mxu0 %v156
    %v658 = vpop.f32.mrf.mxu0
    %v659 = vadd.f32 %v645, %v658
    %v660 = vpop.f32.mrf.mxu0
    %v661 = vadd.f32 %v647, %v660
    %662 = vdwg.mxu0
    %v663 = vmax.f32 %v575, 0.0
    %v664 = vmax.f32 %v603, 0.0
    %v665 = vmax.f32 %v631, 0.0
    %v666 = vmax.f32 %v659, 0.0
    %v667 = vmax.f32 %v577, 0.0
    %v668 = vmax.f32 %v605, 0.0
    %v669 = vmax.f32 %v633, 0.0
    %v670 = vmax.f32 %v661, 0.0
    %v671 = vpack.c.bf16 %v667, %v663
    %v672 = vpack.c.bf16 %v668, %v664
    %v673 = vpack.c.bf16 %v669, %v665
    %v674 = vpack.c.bf16 %v670, %v666
    %v675 = vld [vmem:[#allocation5] sm:$0xff]
    %v676 = vld [vmem:[#allocation5 + $0x8] sm:$0xff]
    %v677 = vld [vmem:[#allocation5 + $0x10] sm:$0xff]
    %v678 = vld [vmem:[#allocation5 + $0x18] sm:$0xff]
    %v679 = vld [vmem:[#allocation5 + $0x20] sm:$0xff]
    %v680 = vld [vmem:[#allocation5 + $0x28] sm:$0xff]
    %v681 = vld [vmem:[#allocation5 + $0x30] sm:$0xff]
    %v682 = vld [vmem:[#allocation5 + $0x38] sm:$0xff]
    %v683 = vld [vmem:[#allocation5 + $0x40] sm:$0xff]
    %v684 = vld [vmem:[#allocation5 + $0x48] sm:$0xff]
    %v685 = vld [vmem:[#allocation5 + $0x50] sm:$0xff]
    %v686 = vld [vmem:[#allocation5 + $0x58] sm:$0xff]
    %v687 = vld [vmem:[#allocation5 + $0x60] sm:$0xff]
    %v688 = vld [vmem:[#allocation5 + $0x68] sm:$0xff]
    %v689 = vld [vmem:[#allocation5 + $0x70] sm:$0xff]
    %v690 = vld [vmem:[#allocation5 + $0x78] sm:$0xff]
    %v691 = vld [vmem:[#allocation5 + $0x80] sm:$0xff]
    %v692 = vld [vmem:[#allocation5 + $0x88] sm:$0xff]
    %v693 = vld [vmem:[#allocation5 + $0x90] sm:$0xff]
    %v694 = vld [vmem:[#allocation5 + $0x98] sm:$0xff]
    %v695 = vld [vmem:[#allocation5 + $0xa0] sm:$0xff]
    %v696 = vld [vmem:[#allocation5 + $0xa8] sm:$0xff]
    %v697 = vld [vmem:[#allocation5 + $0xb0] sm:$0xff]
    %v698 = vld [vmem:[#allocation5 + $0xb8] sm:$0xff]
    %v699 = vld [vmem:[#allocation5 + $0xc0] sm:$0xff]
    %v700 = vld [vmem:[#allocation5 + $0xc8] sm:$0xff]
    %v701 = vld [vmem:[#allocation5 + $0xd0] sm:$0xff]
    %v702 = vld [vmem:[#allocation5 + $0xd8] sm:$0xff]
    %v703 = vld [vmem:[#allocation5 + $0xe0] sm:$0xff]
    %v704 = vld [vmem:[#allocation5 + $0xe8] sm:$0xff]
    %v705 = vld [vmem:[#allocation5 + $0xf0] sm:$0xff]
    %v706 = vld [vmem:[#allocation5 + $0xf8] sm:$0xff]
    %v707 = vld [vmem:[#allocation5 + $0x100] sm:$0xff]
    %v708 = vld [vmem:[#allocation5 + $0x108] sm:$0xff]
    %v709 = vld [vmem:[#allocation5 + $0x110] sm:$0xff]
    %v710 = vld [vmem:[#allocation5 + $0x118] sm:$0xff]
    %v711 = vld [vmem:[#allocation5 + $0x120] sm:$0xff]
    %v712 = vld [vmem:[#allocation5 + $0x128] sm:$0xff]
    %v713 = vld [vmem:[#allocation5 + $0x130] sm:$0xff]
    %v714 = vld [vmem:[#allocation5 + $0x138] sm:$0xff]
    %v715 = vld [vmem:[#allocation5 + $0x140] sm:$0xff]
    %v716 = vld [vmem:[#allocation5 + $0x148] sm:$0xff]
    %v717 = vld [vmem:[#allocation5 + $0x150] sm:$0xff]
    %v718 = vld [vmem:[#allocation5 + $0x158] sm:$0xff]
    %v719 = vld [vmem:[#allocation5 + $0x160] sm:$0xff]
    %v720 = vld [vmem:[#allocation5 + $0x168] sm:$0xff]
    %v721 = vld [vmem:[#allocation5 + $0x170] sm:$0xff]
    %v722 = vld [vmem:[#allocation5 + $0x178] sm:$0xff]
    %v723 = vld [vmem:[#allocation5 + $0x180] sm:$0xff]
    %v724 = vld [vmem:[#allocation5 + $0x188] sm:$0xff]
    %v725 = vld [vmem:[#allocation5 + $0x190] sm:$0xff]
    %v726 = vld [vmem:[#allocation5 + $0x198] sm:$0xff]
    %v727 = vld [vmem:[#allocation5 + $0x1a0] sm:$0xff]
    %v728 = vld [vmem:[#allocation5 + $0x1a8] sm:$0xff]
    %v729 = vld [vmem:[#allocation5 + $0x1b0] sm:$0xff]
    %v730 = vld [vmem:[#allocation5 + $0x1b8] sm:$0xff]
    %v731 = vld [vmem:[#allocation5 + $0x1c0] sm:$0xff]
    %v732 = vld [vmem:[#allocation5 + $0x1c8] sm:$0xff]
    %v733 = vld [vmem:[#allocation5 + $0x1d0] sm:$0xff]
    %v734 = vld [vmem:[#allocation5 + $0x1d8] sm:$0xff]
    %v735 = vld [vmem:[#allocation5 + $0x1e0] sm:$0xff]
    %v736 = vld [vmem:[#allocation5 + $0x1e8] sm:$0xff]
    %v737 = vld [vmem:[#allocation5 + $0x1f0] sm:$0xff]
    %v738 = vld [vmem:[#allocation5 + $0x1f8] sm:$0xff]
    %v739 = vld [vmem:[%s6] sm:$0x3]
    %v741 = vperm.slane %v739, 0
    %v742 = vperm.slane %v739, 1
    %v809 = vunpack.c.l.b16 %v675
    %v810 = vunpack.c.h.b16 %v675
    %v811 = vunpack.c.l.b16 %v676
    %v812 = vunpack.c.h.b16 %v676
    %v813 = vunpack.c.l.b16 %v677
    %v814 = vunpack.c.h.b16 %v677
    %v815 = vunpack.c.l.b16 %v678
    %v816 = vunpack.c.h.b16 %v678
    %v817 = vunpack.c.l.b16 %v679
    %v818 = vunpack.c.h.b16 %v679
    %v819 = vunpack.c.l.b16 %v680
    %v820 = vunpack.c.h.b16 %v680
    %v821 = vunpack.c.l.b16 %v681
    %v822 = vunpack.c.h.b16 %v681
    %v823 = vunpack.c.l.b16 %v682
    %v824 = vunpack.c.h.b16 %v682
    %v825 = vunpack.c.l.b16 %v683
    %v826 = vunpack.c.h.b16 %v683
    %v827 = vunpack.c.l.b16 %v684
    %v828 = vunpack.c.h.b16 %v684
    %v829 = vunpack.c.l.b16 %v685
    %v830 = vunpack.c.h.b16 %v685
    %v831 = vunpack.c.l.b16 %v686
    %v832 = vunpack.c.h.b16 %v686
    %v833 = vunpack.c.l.b16 %v687
    %v834 = vunpack.c.h.b16 %v687
    %v835 = vunpack.c.l.b16 %v688
    %v836 = vunpack.c.h.b16 %v688
    %v837 = vunpack.c.l.b16 %v689
    %v838 = vunpack.c.h.b16 %v689
    %v839 = vunpack.c.l.b16 %v690
    %v840 = vunpack.c.h.b16 %v690
    %v841 = vunpack.c.l.b16 %v691
    %v842 = vunpack.c.h.b16 %v691
    %v843 = vunpack.c.l.b16 %v692
    %v844 = vunpack.c.h.b16 %v692
    %v845 = vunpack.c.l.b16 %v693
    %v846 = vunpack.c.h.b16 %v693
    %v847 = vunpack.c.l.b16 %v694
    %v848 = vunpack.c.h.b16 %v694
    %v849 = vunpack.c.l.b16 %v695
    %v850 = vunpack.c.h.b16 %v695
    %v851 = vunpack.c.l.b16 %v696
    %v852 = vunpack.c.h.b16 %v696
    %v853 = vunpack.c.l.b16 %v697
    %v854 = vunpack.c.h.b16 %v697
    %v855 = vunpack.c.l.b16 %v698
    %v856 = vunpack.c.h.b16 %v698
    %v857 = vunpack.c.l.b16 %v699
    %v858 = vunpack.c.h.b16 %v699
    %v859 = vunpack.c.l.b16 %v700
    %v860 = vunpack.c.h.b16 %v700
    %v861 = vunpack.c.l.b16 %v701
    %v862 = vunpack.c.h.b16 %v701
    %v863 = vunpack.c.l.b16 %v702
    %v864 = vunpack.c.h.b16 %v702
    %v865 = vunpack.c.l.b16 %v703
    %v866 = vunpack.c.h.b16 %v703
    %v867 = vunpack.c.l.b16 %v704
    %v868 = vunpack.c.h.b16 %v704
    %v869 = vunpack.c.l.b16 %v705
    %v870 = vunpack.c.h.b16 %v705
    %v871 = vunpack.c.l.b16 %v706
    %v872 = vunpack.c.h.b16 %v706
    %v873 = vunpack.c.l.b16 %v707
    %v874 = vunpack.c.h.b16 %v707
    %v875 = vunpack.c.l.b16 %v708
    %v876 = vunpack.c.h.b16 %v708
    %v877 = vunpack.c.l.b16 %v709
    %v878 = vunpack.c.h.b16 %v709
    %v879 = vunpack.c.l.b16 %v710
    %v880 = vunpack.c.h.b16 %v710
    %v881 = vunpack.c.l.b16 %v711
    %v882 = vunpack.c.h.b16 %v711
    %v883 = vunpack.c.l.b16 %v712
    %v884 = vunpack.c.h.b16 %v712
    %v885 = vunpack.c.l.b16 %v713
    %v886 = vunpack.c.h.b16 %v713
    %v887 = vunpack.c.l.b16 %v714
    %v888 = vunpack.c.h.b16 %v714
    %v889 = vunpack.c.l.b16 %v715
    %v890 = vunpack.c.h.b16 %v715
    %v891 = vunpack.c.l.b16 %v716
    %v892 = vunpack.c.h.b16 %v716
    %v893 = vunpack.c.l.b16 %v717
    %v894 = vunpack.c.h.b16 %v717
    %v895 = vunpack.c.l.b16 %v718
    %v896 = vunpack.c.h.b16 %v718
    %v897 = vunpack.c.l.b16 %v719
    %v898 = vunpack.c.h.b16 %v719
    %v899 = vunpack.c.l.b16 %v720
    %v900 = vunpack.c.h.b16 %v720
    %v901 = vunpack.c.l.b16 %v721
    %v902 = vunpack.c.h.b16 %v721
    %v903 = vunpack.c.l.b16 %v722
    %v904 = vunpack.c.h.b16 %v722
    %v905 = vunpack.c.l.b16 %v723
    %v906 = vunpack.c.h.b16 %v723
    %v907 = vunpack.c.l.b16 %v724
    %v908 = vunpack.c.h.b16 %v724
    %v909 = vunpack.c.l.b16 %v725
    %v910 = vunpack.c.h.b16 %v725
    %v911 = vunpack.c.l.b16 %v726
    %v912 = vunpack.c.h.b16 %v726
    %v913 = vunpack.c.l.b16 %v727
    %v914 = vunpack.c.h.b16 %v727
    %v915 = vunpack.c.l.b16 %v728
    %v916 = vunpack.c.h.b16 %v728
    %v917 = vunpack.c.l.b16 %v729
    %v918 = vunpack.c.h.b16 %v729
    %v919 = vunpack.c.l.b16 %v730
    %v920 = vunpack.c.h.b16 %v730
    %v921 = vunpack.c.l.b16 %v731
    %v922 = vunpack.c.h.b16 %v731
    %v923 = vunpack.c.l.b16 %v732
    %v924 = vunpack.c.h.b16 %v732
    %v925 = vunpack.c.l.b16 %v733
    %v926 = vunpack.c.h.b16 %v733
    %v927 = vunpack.c.l.b16 %v734
    %v928 = vunpack.c.h.b16 %v734
    %v929 = vunpack.c.l.b16 %v735
    %v930 = vunpack.c.h.b16 %v735
    %v931 = vunpack.c.l.b16 %v736
    %v932 = vunpack.c.h.b16 %v736
    %v933 = vunpack.c.l.b16 %v737
    %v934 = vunpack.c.h.b16 %v737
    %v935 = vunpack.c.l.b16 %v738
    %v936 = vunpack.c.h.b16 %v738
    %v937 = vpack.c.b16 %v811, %v809
    %v938 = vpack.c.b16 %v812, %v810
    %v939 = vpack.c.b16 %v815, %v813
    %v940 = vpack.c.b16 %v816, %v814
    %v941 = vpack.c.b16 %v819, %v817
    %v942 = vpack.c.b16 %v820, %v818
    %v943 = vpack.c.b16 %v823, %v821
    %v944 = vpack.c.b16 %v824, %v822
    %v945 = vpack.c.b16 %v827, %v825
    %v946 = vpack.c.b16 %v828, %v826
    %v947 = vpack.c.b16 %v831, %v829
    %v948 = vpack.c.b16 %v832, %v830
    %v949 = vpack.c.b16 %v835, %v833
    %v950 = vpack.c.b16 %v836, %v834
    %v951 = vpack.c.b16 %v839, %v837
    %v952 = vpack.c.b16 %v840, %v838
    %v953 = vpack.c.b16 %v843, %v841
    %v954 = vpack.c.b16 %v844, %v842
    %v955 = vpack.c.b16 %v847, %v845
    %v956 = vpack.c.b16 %v848, %v846
    %v957 = vpack.c.b16 %v851, %v849
    %v958 = vpack.c.b16 %v852, %v850
    %v959 = vpack.c.b16 %v855, %v853
    %v960 = vpack.c.b16 %v856, %v854
    %v961 = vpack.c.b16 %v859, %v857
    %v962 = vpack.c.b16 %v860, %v858
    %v963 = vpack.c.b16 %v863, %v861
    %v964 = vpack.c.b16 %v864, %v862
    %v965 = vpack.c.b16 %v867, %v865
    %v966 = vpack.c.b16 %v868, %v866
    %v967 = vpack.c.b16 %v871, %v869
    %v968 = vpack.c.b16 %v872, %v870
    %v969 = vpack.c.b16 %v875, %v873
    %v970 = vpack.c.b16 %v876, %v874
    %v971 = vpack.c.b16 %v879, %v877
    %v972 = vpack.c.b16 %v880, %v878
    %v973 = vpack.c.b16 %v883, %v881
    %v974 = vpack.c.b16 %v884, %v882
    %v975 = vpack.c.b16 %v887, %v885
    %v976 = vpack.c.b16 %v888, %v886
    %v977 = vpack.c.b16 %v891, %v889
    %v978 = vpack.c.b16 %v892, %v890
    %v979 = vpack.c.b16 %v895, %v893
    %v980 = vpack.c.b16 %v896, %v894
    %v981 = vpack.c.b16 %v899, %v897
    %v982 = vpack.c.b16 %v900, %v898
    %v983 = vpack.c.b16 %v903, %v901
    %v984 = vpack.c.b16 %v904, %v902
    %v985 = vpack.c.b16 %v907, %v905
    %v986 = vpack.c.b16 %v908, %v906
    %v987 = vpack.c.b16 %v911, %v909
    %v988 = vpack.c.b16 %v912, %v910
    %v989 = vpack.c.b16 %v915, %v913
    %v990 = vpack.c.b16 %v916, %v914
    %v991 = vpack.c.b16 %v919, %v917
    %v992 = vpack.c.b16 %v920, %v918
    %v993 = vpack.c.b16 %v923, %v921
    %v994 = vpack.c.b16 %v924, %v922
    %v995 = vpack.c.b16 %v927, %v925
    %v996 = vpack.c.b16 %v928, %v926
    %v997 = vpack.c.b16 %v931, %v929
    %v998 = vpack.c.b16 %v932, %v930
    %v999 = vpack.c.b16 %v935, %v933
    %v1000 = vpack.c.b16 %v936, %v934
    %1065 = vmatpush.bf16.msra.mxu0 %v951
    %1066 = vmatpush.bf16.msra.mxu0 %v949
    %1067 = vmatpush.bf16.msra.mxu0 %v947
    %1068 = vmatpush.bf16.msra.mxu0 %v945
    %1069 = vmatpush.bf16.msra.mxu0 %v943
    %1070 = vmatpush.bf16.msra.mxu0 %v941
    %1071 = vmatpush.bf16.msra.mxu0 %v939
    %1072 = vmatpush.bf16.msra.mxu0 %v937
    %1073 = vmatmul.bf16.gmra.mxu0 %v671
    %v1074 = vpop.f32.mrf.mxu0
    %v1075 = vadd.f32 %v741, %v1074
    %v1076 = vpop.f32.mrf.mxu0
    %v1077 = vadd.f32 %v741, %v1076
    %1078 = vdwg.mxu0
    %1079 = vmatpush.bf16.msra.mxu0 %v967
    %1080 = vmatpush.bf16.msra.mxu0 %v965
    %1081 = vmatpush.bf16.msra.mxu0 %v963
    %1082 = vmatpush.bf16.msra.mxu0 %v961
    %1083 = vmatpush.bf16.msra.mxu0 %v959
    %1084 = vmatpush.bf16.msra.mxu0 %v957
    %1085 = vmatpush.bf16.msra.mxu0 %v955
    %1086 = vmatpush.bf16.msra.mxu0 %v953
    %1087 = vmatmul.bf16.gmra.mxu0 %v672
    %v1088 = vpop.f32.mrf.mxu0
    %v1089 = vadd.f32 %v1075, %v1088
    %v1090 = vpop.f32.mrf.mxu0
    %v1091 = vadd.f32 %v1077, %v1090
    %1092 = vdwg.mxu0
    %1093 = vmatpush.bf16.msra.mxu0 %v983
    %1094 = vmatpush.bf16.msra.mxu0 %v981
    %1095 = vmatpush.bf16.msra.mxu0 %v979
    %1096 = vmatpush.bf16.msra.mxu0 %v977
    %1097 = vmatpush.bf16.msra.mxu0 %v975
    %1098 = vmatpush.bf16.msra.mxu0 %v973
    %1099 = vmatpush.bf16.msra.mxu0 %v971
    %1100 = vmatpush.bf16.msra.mxu0 %v969
    %1101 = vmatmul.bf16.gmra.mxu0 %v673
    %v1102 = vpop.f32.mrf.mxu0
    %v1103 = vadd.f32 %v1089, %v1102
    %v1104 = vpop.f32.mrf.mxu0
    %v1105 = vadd.f32 %v1091, %v1104
    %1106 = vdwg.mxu0
    %1107 = vmatpush.bf16.msra.mxu0 %v999
    %1108 = vmatpush.bf16.msra.mxu0 %v997
    %1109 = vmatpush.bf16.msra.mxu0 %v995
    %1110 = vmatpush.bf16.msra.mxu0 %v993
    %1111 = vmatpush.bf16.msra.mxu0 %v991
    %1112 = vmatpush.bf16.msra.mxu0 %v989
    %1113 = vmatpush.bf16.msra.mxu0 %v987
    %1114 = vmatpush.bf16.msra.mxu0 %v985
    %1115 = vmatmul.bf16.gmra.mxu0 %v674
    %v1116 = vpop.f32.mrf.mxu0
    %v1117 = vadd.f32 %v1103, %v1116
    %v1118 = vpop.f32.mrf.mxu0
    %v1119 = vadd.f32 %v1105, %v1118
    %1120 = vdwg.mxu0
    %1121 = vmatpush.bf16.msra.mxu0 %v952
    %1122 = vmatpush.bf16.msra.mxu0 %v950
    %1123 = vmatpush.bf16.msra.mxu0 %v948
    %1124 = vmatpush.bf16.msra.mxu0 %v946
    %1125 = vmatpush.bf16.msra.mxu0 %v944
    %1126 = vmatpush.bf16.msra.mxu0 %v942
    %1127 = vmatpush.bf16.msra.mxu0 %v940
    %1128 = vmatpush.bf16.msra.mxu0 %v938
    %1129 = vmatmul.bf16.gmra.mxu0 %v671
    %v1130 = vpop.f32.mrf.mxu0
    %v1131 = vadd.f32 %v742, %v1130
    %v1132 = vpop.f32.mrf.mxu0
    %v1133 = vadd.f32 %v742, %v1132
    %1134 = vdwg.mxu0
    %1135 = vmatpush.bf16.msra.mxu0 %v968
    %1136 = vmatpush.bf16.msra.mxu0 %v966
    %1137 = vmatpush.bf16.msra.mxu0 %v964
    %1138 = vmatpush.bf16.msra.mxu0 %v962
    %1139 = vmatpush.bf16.msra.mxu0 %v960
    %1140 = vmatpush.bf16.msra.mxu0 %v958
    %1141 = vmatpush.bf16.msra.mxu0 %v956
    %1142 = vmatpush.bf16.msra.mxu0 %v954
    %1143 = vmatmul.bf16.gmra.mxu0 %v672
    %v1144 = vpop.f32.mrf.mxu0
    %v1145 = vadd.f32 %v1131, %v1144
    %v1146 = vpop.f32.mrf.mxu0
    %v1147 = vadd.f32 %v1133, %v1146
    %1148 = vdwg.mxu0
    %1149 = vmatpush.bf16.msra.mxu0 %v984
    %1150 = vmatpush.bf16.msra.mxu0 %v982
    %1151 = vmatpush.bf16.msra.mxu0 %v980
    %1152 = vmatpush.bf16.msra.mxu0 %v978
    %1153 = vmatpush.bf16.msra.mxu0 %v976
    %1154 = vmatpush.bf16.msra.mxu0 %v974
    %1155 = vmatpush.bf16.msra.mxu0 %v972
    %1156 = vmatpush.bf16.msra.mxu0 %v970
    %1157 = vmatmul.bf16.gmra.mxu0 %v673
    %v1158 = vpop.f32.mrf.mxu0
    %v1159 = vadd.f32 %v1145, %v1158
    %v1160 = vpop.f32.mrf.mxu0
    %v1161 = vadd.f32 %v1147, %v1160
    %1162 = vdwg.mxu0
    %1163 = vmatpush.bf16.msra.mxu0 %v1000
    %1164 = vmatpush.bf16.msra.mxu0 %v998
    %1165 = vmatpush.bf16.msra.mxu0 %v996
    %1166 = vmatpush.bf16.msra.mxu0 %v994
    %1167 = vmatpush.bf16.msra.mxu0 %v992
    %1168 = vmatpush.bf16.msra.mxu0 %v990
    %1169 = vmatpush.bf16.msra.mxu0 %v988
    %1170 = vmatpush.bf16.msra.mxu0 %v986
    %1171 = vmatmul.bf16.gmra.mxu0 %v674
    %v1172 = vpop.f32.mrf.mxu0
    %v1173 = vadd.f32 %v1159, %v1172
    %v1174 = vpop.f32.mrf.mxu0
    %v1175 = vadd.f32 %v1161, %v1174
    %1176 = vdwg.mxu0
    %v1177 = vadd.f32 %v61, %v1117
    %v1178 = vadd.f32 %v62, %v1173
    %v1179 = vadd.f32 %v63, %v1119
    %v1180 = vadd.f32 %v64, %v1175
    %1181 = vst [vmem:[#allocation7] sm:$0xff] %v1177
    %1182 = vst [vmem:[#allocation7 + $0x8] sm:$0xff] %v1178
    %1183 = vst [vmem:[#allocation7 + $0x10] sm:$0xff] %v1179
    %1184 = vst [vmem:[#allocation7 + $0x18] sm:$0xff] %v1180
    // Predicated region
    $region38: #{encoder_layer_forward.5} parent=1 // pred_check
      _
    $region39: #{encoder_layer_forward.5} parent=1 // pred_check_branch
      %1186 = sbr.rel (0) target = $region41
    $region40: #{encoder_layer_forward.5} parent=1 // pred_region
      %1188 = vsyncadd [#allocation4], 0
      %s1189 = sshll.u32 [#allocation7], 4
      %s1190 = int_to_ptr.vmem [resolvable:$true] %s1189
      %s1191 = sshll.u32 %s7, 4
      %s1192 = int_to_ptr.hbm [resolvable:$true] %s1191
      %1197 = dma.vmem_to_hbm [thread:$0]  %s1190, 512, %s1192, [#allocation4], 256, 256, 16
    $region41: #{encoder_layer_forward.5} parent=1 // pred_fallthru
      _
    // Predicated region
    $region42: #{encoder_layer_forward.5} parent=1 // pred_check
      _
    $region43: #{encoder_layer_forward.5} parent=1 // pred_check_branch
      %1199 = sbr.rel (0) target = $region45
    $region44: #{encoder_layer_forward.5} parent=1 // pred_region
      %1201 = dma.done [#allocation4], 512
    $region45: #{encoder_layer_forward.5} parent=1 // pred_fallthru
      _
    %1202 = vsyncpa [#allocation3], 1
    %1203 = vsyncpa [#allocation6], 1
    %1204 = vsyncpa [#allocation4], 1

</llo_original>
